<compile_context>
chip_gen: v7x
topology: tpu7x:2x2x1
jax: 0.10.0
libtpu: 0.0.40
codegen_flags: <defaults>
</compile_context>

<pallas_src>
import functools

import jax
import jax.numpy as jnp
from jax.experimental import pallas as pl
from jax.experimental.pallas import tpu as pltpu

EPS = 1e-5  # PyTorch InstanceNorm2d default eps (affine=False, no running stats)


def _shift_lanes(v, s):
    """out[..., p] = v[..., (p + s) % L] for a static shift s (XLU lane rotate)."""
    L = v.shape[-1]
    k = (-s) % L                      # np.roll-style shift equivalent to index shift +s
    if k == 0:
        return v
    return pltpu.roll(v, k, axis=v.ndim - 1)


def residual_block_kernel(x_ref, ij_ref, w1_ref, b1_ref, w2_ref, b2_ref, out_ref,
                          *, H, W, Wp, Pp, nb, use_bf16):
    Hp = H + 2
    C, L = x_ref.shape                # L == nb * Pp

    # Padded-grid coordinates of every lane (precomputed host-side: no vector
    # int div/mod in-kernel).  Kept (1, L): sublane broadcast in the selects /
    # multiplies is free, no (C, L) mask materialisation.
    ip = ij_ref[0:1, :]               # (1, L); dead lanes carry -1
    jp = ij_ref[1:2, :]
    row0 = ip == 0
    rowL = ip == Hp - 1
    col0 = jp == 0
    colL = jp == Wp - 1
    ip_p = ip[:, :Pp]                 # one Pp period (lane-tile aligned slice)
    jp_p = jp[:, :Pp]
    interior_p = ((ip_p >= 1) & (ip_p <= H) &
                  (jp_p >= 1) & (jp_p <= W)).astype(jnp.float32)   # (1, Pp)
    inv_cnt = 1.0 / float(H * W)

    w1 = w1_ref[...]                  # (C, 9C)
    w2 = w2_ref[...]
    b1 = b1_ref[...]                  # (C, 1)
    b2 = b2_ref[...]

    def reflect_fix(v):
        # Overwrite the 1-pixel ring of each sample's padded plane with
        # ReflectionPad2d(1) of its interior.  Rows first, then columns ->
        # corners come out right.  All selected sources lie inside the same
        # sample's plane, so lane-roll wraparound never leaks across samples.
        v = jnp.where(row0, _shift_lanes(v, 2 * Wp), v)    # row 0     <- row 2
        v = jnp.where(rowL, _shift_lanes(v, -2 * Wp), v)   # row Hp-1  <- row Hp-3
        v = jnp.where(col0, _shift_lanes(v, 2), v)         # col 0     <- col 2
        v = jnp.where(colL, _shift_lanes(v, -2), v)        # col Wp-1  <- col Wp-3
        return v

    def conv3x3(v, w, b):
        # Fused im2col: 9 lane-rolled taps stacked on the sublane axis, then a
        # single (C, 9C) @ (9C, L) MXU matmul.  Ring/dead-lane outputs are
        # garbage but finite; they are excluded from IN stats and discarded.
        if use_bf16:
            v = v.astype(jnp.bfloat16)          # cast BEFORE the rolls/concat
        cols = jnp.concatenate(
            [_shift_lanes(v, (dh - 1) * Wp + (dw - 1))
             for dh in range(3) for dw in range(3)],
            axis=0)                              # (9C, L)
        # TODO(synk): weight-stationary orientation (cols @ w.T) for C >= ~128.
        return jnp.dot(w, cols, preferred_element_type=jnp.float32) + b

    def instance_norm(y):
        # Per-sample two-pass f32 stats over interior pixels only; rsqrt -> EUP.
        pieces = []
        for s in range(nb):
            ys = y[:, s * Pp:(s + 1) * Pp]                        # aligned slice
            mean = jnp.sum(ys * interior_p, axis=1, keepdims=True) * inv_cnt
            cen = (ys - mean) * interior_p
            var = jnp.sum(cen * cen, axis=1, keepdims=True) * inv_cnt
            pieces.append((ys - mean) * jax.lax.rsqrt(var + EPS))
        return pieces[0] if nb == 1 else jnp.concatenate(pieces, axis=1)

    x = reflect_fix(x_ref[...].astype(jnp.float32))               # (C, L)
    y = jnp.maximum(instance_norm(conv3x3(x, w1, b1)), 0.0)
    z = instance_norm(conv3x3(reflect_fix(y), w2, b2))
    out_ref[...] = (x + z).astype(out_ref.dtype)   # ring/dead lanes discarded host-side


def residual_block(x_nchw, w1, b1, w2, b2, *, samples_per_block=None,
                   use_bf16_matmul=False):
    """x_nchw: (N, C, H, W) float32; w*: (Cout, Cin, 3, 3); b*: (Cout,)."""
    N, C, H, W = x_nchw.shape
    assert H >= 2 and W >= 2, "ReflectionPad2d(1) requires H, W >= 2"
    Hp, Wp = H + 2, W + 2
    P = Hp * Wp
    Pp = ((P + 127) // 128) * 128          # lane-dim padded to a multiple of 128

    # ---- choose how many samples share one grid step (lane-batched) ---------
    per_sample_bytes = C * Pp * 4
    if samples_per_block is None:
        nb = max(1, (512 * 1024) // per_sample_bytes)          # >= ~0.5 MB / step
        nb = min(nb, 8)                                        # bound unroll / vregs
        nb = min(nb, max(1, N // 2))                           # grid >= 2 (v7x, 2 TCs)
        nb = min(nb, max(1, (24 << 20) // (16 * per_sample_bytes)))  # VMEM cap
    else:
        nb = int(samples_per_block)
    nb = max(1, min(nb, N))
    while N % nb:
        nb -= 1
    G = N // nb
    L = nb * Pp

    # ---- host-side layout plumbing (no module math here) --------------------
    # zero-pad ring + dead lanes; the ring is overwritten by the in-kernel
    # reflection fix, dead lanes are masked out of the IN statistics.
    xp = jnp.pad(x_nchw, ((0, 0), (0, 0), (1, 1), (1, 1))).reshape(N, C, P)
    xp = jnp.pad(xp, ((0, 0), (0, 0), (0, Pp - P)))
    xg = xp.reshape(G, nb, C, Pp).transpose(0, 2, 1, 3).reshape(G, C, L)

    # weights in fused-im2col layout: w_mat[co, (dh*3+dw)*C + ci] = w[co, ci, dh, dw]
    w1m = jnp.transpose(w1, (0, 2, 3, 1)).reshape(C, 9 * C)
    w2m = jnp.transpose(w2, (0, 2, 3, 1)).reshape(C, 9 * C)
    if use_bf16_matmul:
        w1m = w1m.astype(jnp.bfloat16)
        w2m = w2m.astype(jnp.bfloat16)
    b1m = b1.reshape(C, 1).astype(jnp.float32)
    b2m = b2.reshape(C, 1).astype(jnp.float32)

    # (ip, jp) padded-grid coordinates per lane; -1 on dead padding lanes.
    q = jnp.arange(Pp, dtype=jnp.int32)
    ip = jnp.where(q < P, q // Wp, -1)
    jp = jnp.where(q < P, q % Wp, -1)
    ij_full = jnp.tile(jnp.stack([ip, jp]), (1, nb))           # (2, L) int32

    kernel = functools.partial(residual_block_kernel, H=H, W=W, Wp=Wp, Pp=Pp,
                               nb=nb, use_bf16=use_bf16_matmul)

    # explicit VMEM limit (v5e scoped default is 16 MiB; v7x physical is 64 MiB)
    block_bytes = C * L * 4
    inv_bytes = (2 * L + 2 * (9 * C * C) + 2 * C) * 4
    live_bytes = (9 + 6) * C * L * 4           # cols + live (C, L) temporaries
    vmem_limit = int(min(64 << 20, max(32 << 20,
                                       2 * (4 * block_bytes + 2 * inv_bytes + live_bytes))))

    out_shape = jax.ShapeDtypeStruct((G, C, L), x_nchw.dtype)

    def build(single_buffer_invariants):
        def const_spec(shape):
            imap = lambda n: (0, 0)
            if single_buffer_invariants:
                # grid-invariant operand: one VMEM buffer instead of two
                return pl.BlockSpec(shape, imap, pipeline_mode=pl.Buffered(1))
            return pl.BlockSpec(shape, imap)

        return pl.pallas_call(
            kernel,
            out_shape=out_shape,
            grid_spec=pltpu.PrefetchScalarGridSpec(
                num_scalar_prefetch=0,
                grid=(G,),
                in_specs=[
                    pl.BlockSpec((None, C, L), lambda n: (n, 0, 0)),
                    const_spec((2, L)),
                    const_spec((C, 9 * C)),
                    const_spec((C, 1)),
                    const_spec((C, 9 * C)),
                    const_spec((C, 1)),
                ],
                out_specs=pl.BlockSpec((None, C, L), lambda n: (n, 0, 0)),
            ),
            compiler_params=pltpu.CompilerParams(
                dimension_semantics=("parallel",),
                vmem_limit_bytes=vmem_limit),
        )

    args = (xg, ij_full, w1m, b1m, w2m, b2m)
    try:
        out_p = jax.block_until_ready(build(True)(*args))
    except Exception:
        # pipeline_mode=pl.Buffered(1) not supported on this jax version ->
        # fall back to default double-buffering of the tiny invariant operands.
        out_p = build(False)(*args)

    # reverse the layout plumbing: drop dead lanes + padding ring, return NCHW.
    out = out_p.reshape(G, C, nb, Pp).transpose(0, 2, 1, 3).reshape(N, C, Pp)
    return out[:, :, :P].reshape(N, C, Hp, Wp)[:, :, 1:H + 1, 1:W + 1]


def residual_block_ref(x, w1, b1, w2, b2):
    # Pure-JAX reference (matches PyTorch semantics) for correctness check.
    def reflect_pad(a):
        return jnp.pad(a, ((0, 0), (0, 0), (1, 1), (1, 1)), mode="reflect")

    def conv(a, w, b):
        y = jax.lax.conv_general_dilated(
            a, w, (1, 1), "VALID",
            dimension_numbers=("NCHW", "OIHW", "NCHW"))
        return y + b[None, :, None, None]

    def inorm(a):
        m = jnp.mean(a, axis=(2, 3), keepdims=True)
        v = jnp.mean((a - m) ** 2, axis=(2, 3), keepdims=True)
        return (a - m) / jnp.sqrt(v + EPS)

    y = jnp.maximum(inorm(conv(reflect_pad(x), w1, b1)), 0.0)
    z = inorm(conv(reflect_pad(y), w2, b2))
    return x + z


if __name__ == "__main__":
    N, C, H, W = 2, 8, 16, 16
    key = jax.random.PRNGKey(0)
    kx, kw1, kb1, kw2, kb2 = jax.random.split(key, 5)

    x = jax.random.normal(kx, (N, C, H, W), jnp.float32)
    # Deterministic synthetic Conv2d(C, C, 3) parameters, ~1/sqrt(fan_in) scale.
    scale = 1.0 / jnp.sqrt(jnp.float32(C * 3 * 3))
    w1 = jax.random.normal(kw1, (C, C, 3, 3), jnp.float32) * scale
    b1 = jax.random.normal(kb1, (C,), jnp.float32) * scale
    w2 = jax.random.normal(kw2, (C, C, 3, 3), jnp.float32) * scale
    b2 = jax.random.normal(kb2, (C,), jnp.float32) * scale

    out = jax.block_until_ready(residual_block(x, w1, b1, w2, b2))
    ref = jax.block_until_ready(residual_block_ref(x, w1, b1, w2, b2))
    assert out.shape == x.shape and out.dtype == x.dtype
    err = float(jnp.max(jnp.abs(out - ref)))
    assert jnp.allclose(out, ref, rtol=1e-4, atol=1e-4), err

    # Also exercise the lane-batched multi-sample-per-step path (nb > 1).
    x4 = jax.random.normal(jax.random.PRNGKey(1), (4, C, H, W), jnp.float32)
    out4 = jax.block_until_ready(
        residual_block(x4, w1, b1, w2, b2, samples_per_block=2))
    ref4 = jax.block_until_ready(residual_block_ref(x4, w1, b1, w2, b2))
    err4 = float(jnp.max(jnp.abs(out4 - ref4)))
    assert jnp.allclose(out4, ref4, rtol=1e-4, atol=1e-4), err4

    print("KERNEL_OK")
</pallas_src>

<mosaic_0001>
module attributes {stable_mosaic.version = 11 : i64} {
  func.func @residual_block_kernel(%arg0: i32, %arg1: memref<1x8x384xf32, #tpu.memory_space<vmem>>, %arg2: memref<2x384xi32, #tpu.memory_space<vmem>>, %arg3: memref<8x72xf32, #tpu.memory_space<vmem>>, %arg4: memref<8x1xf32, #tpu.memory_space<vmem>>, %arg5: memref<8x72xf32, #tpu.memory_space<vmem>>, %arg6: memref<8x1xf32, #tpu.memory_space<vmem>>, %arg7: memref<1x8x384xf32, #tpu.memory_space<vmem>>) attributes {dimension_semantics = [#tpu.dimension_semantics<parallel>], iteration_bounds = array<i64: 2>, scalar_prefetch = 0 : i64, scratch_operands = 0 : i64, tpu.core_type = #tpu.core_type<tc>, window_params = [{transform_indices = @transform_0, window_bounds = array<i64: 1, 8, 384>}, {pipeline_mode = #tpu.pipeline_mode<synchronous>, transform_indices = @transform_1, window_bounds = array<i64: 2, 384>}, {pipeline_mode = #tpu.pipeline_mode<synchronous>, transform_indices = @transform_2, window_bounds = array<i64: 8, 72>}, {pipeline_mode = #tpu.pipeline_mode<synchronous>, transform_indices = @transform_3, window_bounds = array<i64: 8, 1>}, {pipeline_mode = #tpu.pipeline_mode<synchronous>, transform_indices = @transform_4, window_bounds = array<i64: 8, 72>}, {pipeline_mode = #tpu.pipeline_mode<synchronous>, transform_indices = @transform_5, window_bounds = array<i64: 8, 1>}, {transform_indices = @transform_6, window_bounds = array<i64: 1, 8, 384>}]} {
    %c0 = arith.constant 0 : index
    %c0_0 = arith.constant 0 : index
    %0 = vector.load %arg2[%c0, %c0_0] : memref<2x384xi32, #tpu.memory_space<vmem>>, vector<1x384xi32>
    %c1 = arith.constant 1 : index
    %c0_1 = arith.constant 0 : index
    %1 = vector.load %arg2[%c1, %c0_1] : memref<2x384xi32, #tpu.memory_space<vmem>>, vector<1x384xi32>
    %c0_i32 = arith.constant 0 : i32
    %2 = vector.broadcast %c0_i32 : i32 to vector<1x384xi32>
    %3 = arith.cmpi eq, %0, %2 : vector<1x384xi32>
    %c17_i32 = arith.constant 17 : i32
    %4 = vector.broadcast %c17_i32 : i32 to vector<1x384xi32>
    %5 = arith.cmpi eq, %0, %4 : vector<1x384xi32>
    %c0_i32_2 = arith.constant 0 : i32
    %6 = vector.broadcast %c0_i32_2 : i32 to vector<1x384xi32>
    %7 = arith.cmpi eq, %1, %6 : vector<1x384xi32>
    %c17_i32_3 = arith.constant 17 : i32
    %8 = vector.broadcast %c17_i32_3 : i32 to vector<1x384xi32>
    %9 = arith.cmpi eq, %1, %8 : vector<1x384xi32>
    %c1_i32 = arith.constant 1 : i32
    %10 = vector.broadcast %c1_i32 : i32 to vector<1x384xi32>
    %11 = arith.cmpi sge, %0, %10 : vector<1x384xi32>
    %c16_i32 = arith.constant 16 : i32
    %12 = vector.broadcast %c16_i32 : i32 to vector<1x384xi32>
    %13 = arith.cmpi sle, %0, %12 : vector<1x384xi32>
    %14 = arith.andi %11, %13 : vector<1x384xi1>
    %c1_i32_4 = arith.constant 1 : i32
    %15 = vector.broadcast %c1_i32_4 : i32 to vector<1x384xi32>
    %16 = arith.cmpi sge, %1, %15 : vector<1x384xi32>
    %17 = arith.andi %14, %16 : vector<1x384xi1>
    %c16_i32_5 = arith.constant 16 : i32
    %18 = vector.broadcast %c16_i32_5 : i32 to vector<1x384xi32>
    %19 = arith.cmpi sle, %1, %18 : vector<1x384xi32>
    %20 = arith.andi %17, %19 : vector<1x384xi1>
    %21 = arith.extui %20 : vector<1x384xi1> to vector<1x384xi32>
    %22 = arith.sitofp %21 : vector<1x384xi32> to vector<1x384xf32>
    %c0_6 = arith.constant 0 : index
    %c0_7 = arith.constant 0 : index
    %23 = vector.load %arg3[%c0_6, %c0_7] : memref<8x72xf32, #tpu.memory_space<vmem>>, vector<8x72xf32>
    %c0_8 = arith.constant 0 : index
    %c0_9 = arith.constant 0 : index
    %24 = vector.load %arg5[%c0_8, %c0_9] : memref<8x72xf32, #tpu.memory_space<vmem>>, vector<8x72xf32>
    %c0_10 = arith.constant 0 : index
    %c0_11 = arith.constant 0 : index
    %25 = vector.load %arg4[%c0_10, %c0_11] : memref<8x1xf32, #tpu.memory_space<vmem>>, vector<8x1xf32>
    %c0_12 = arith.constant 0 : index
    %c0_13 = arith.constant 0 : index
    %26 = vector.load %arg6[%c0_12, %c0_13] : memref<8x1xf32, #tpu.memory_space<vmem>>, vector<8x1xf32>
    %c0_14 = arith.constant 0 : index
    %c0_15 = arith.constant 0 : index
    %c0_16 = arith.constant 0 : index
    %27 = vector.load %arg1[%c0_14, %c0_15, %c0_16] : memref<1x8x384xf32, #tpu.memory_space<vmem>>, vector<1x8x384xf32>
    %28 = vector.shape_cast %27 : vector<1x8x384xf32> to vector<8x384xf32>
    %c348_i32 = arith.constant 348 : i32
    %29 = tpu.dynamic_rotate %28 by %c348_i32 dim 1 : vector<8x384xf32>, i32 -> vector<8x384xf32>
    %30 = vector.shape_cast %3 : vector<1x384xi1> to vector<1x384xi1>
    %31 = vector.broadcast %30 : vector<1x384xi1> to vector<8x384xi1>
    %32 = arith.select %31, %29, %28 : vector<8x384xi1>, vector<8x384xf32>
    %c36_i32 = arith.constant 36 : i32
    %33 = tpu.dynamic_rotate %32 by %c36_i32 dim 1 : vector<8x384xf32>, i32 -> vector<8x384xf32>
    %34 = vector.shape_cast %5 : vector<1x384xi1> to vector<1x384xi1>
    %35 = vector.broadcast %34 : vector<1x384xi1> to vector<8x384xi1>
    %36 = arith.select %35, %33, %32 : vector<8x384xi1>, vector<8x384xf32>
    %c382_i32 = arith.constant 382 : i32
    %37 = tpu.dynamic_rotate %36 by %c382_i32 dim 1 : vector<8x384xf32>, i32 -> vector<8x384xf32>
    %38 = vector.shape_cast %7 : vector<1x384xi1> to vector<1x384xi1>
    %39 = vector.broadcast %38 : vector<1x384xi1> to vector<8x384xi1>
    %40 = arith.select %39, %37, %36 : vector<8x384xi1>, vector<8x384xf32>
    %c2_i32 = arith.constant 2 : i32
    %41 = tpu.dynamic_rotate %40 by %c2_i32 dim 1 : vector<8x384xf32>, i32 -> vector<8x384xf32>
    %42 = vector.shape_cast %9 : vector<1x384xi1> to vector<1x384xi1>
    %43 = vector.broadcast %42 : vector<1x384xi1> to vector<8x384xi1>
    %44 = arith.select %43, %41, %40 : vector<8x384xi1>, vector<8x384xf32>
    %c19_i32 = arith.constant 19 : i32
    %45 = tpu.dynamic_rotate %44 by %c19_i32 dim 1 : vector<8x384xf32>, i32 -> vector<8x384xf32>
    %c18_i32 = arith.constant 18 : i32
    %46 = tpu.dynamic_rotate %44 by %c18_i32 dim 1 : vector<8x384xf32>, i32 -> vector<8x384xf32>
    %c17_i32_17 = arith.constant 17 : i32
    %47 = tpu.dynamic_rotate %44 by %c17_i32_17 dim 1 : vector<8x384xf32>, i32 -> vector<8x384xf32>
    %c1_i32_18 = arith.constant 1 : i32
    %48 = tpu.dynamic_rotate %44 by %c1_i32_18 dim 1 : vector<8x384xf32>, i32 -> vector<8x384xf32>
    %c383_i32 = arith.constant 383 : i32
    %49 = tpu.dynamic_rotate %44 by %c383_i32 dim 1 : vector<8x384xf32>, i32 -> vector<8x384xf32>
    %c367_i32 = arith.constant 367 : i32
    %50 = tpu.dynamic_rotate %44 by %c367_i32 dim 1 : vector<8x384xf32>, i32 -> vector<8x384xf32>
    %c366_i32 = arith.constant 366 : i32
    %51 = tpu.dynamic_rotate %44 by %c366_i32 dim 1 : vector<8x384xf32>, i32 -> vector<8x384xf32>
    %c365_i32 = arith.constant 365 : i32
    %52 = tpu.dynamic_rotate %44 by %c365_i32 dim 1 : vector<8x384xf32>, i32 -> vector<8x384xf32>
    %53 = tpu.concatenate %45, %46, %47, %48, %44, %49, %50, %51, %52 in 0 : vector<8x384xf32>, vector<8x384xf32>, vector<8x384xf32>, vector<8x384xf32>, vector<8x384xf32>, vector<8x384xf32>, vector<8x384xf32>, vector<8x384xf32>, vector<8x384xf32> -> vector<72x384xf32>
    %cst = arith.constant dense<0.000000e+00> : vector<8x384xf32>
    %54 = tpu.matmul %23, %53, %cst {dimension_numbers = #tpu.dot_dimension_numbers<[1], [0], [0], [1], [0, 0, 1, 1], [], []>} : vector<8x72xf32>, vector<72x384xf32>, vector<8x384xf32> -> vector<8x384xf32>
    %55 = vector.broadcast %25 : vector<8x1xf32> to vector<8x384xf32>
    %56 = arith.addf %54, %55 : vector<8x384xf32>
    %57 = vector.broadcast %22 : vector<1x384xf32> to vector<8x384xf32>
    %58 = arith.mulf %56, %57 : vector<8x384xf32>
    %cst_19 = arith.constant dense<0.000000e+00> : vector<8xf32>
    %59 = vector.multi_reduction <add>, %58, %cst_19 [1] : vector<8x384xf32> to vector<8xf32>
    %60 = vector.shape_cast %59 : vector<8xf32> to vector<8x1xf32>
    %cst_20 = arith.constant 3.906250e-03 : f32
    %61 = vector.broadcast %cst_20 : f32 to vector<8x1xf32>
    %62 = arith.mulf %60, %61 : vector<8x1xf32>
    %63 = vector.broadcast %62 : vector<8x1xf32> to vector<8x384xf32>
    %64 = arith.subf %56, %63 : vector<8x384xf32>
    %65 = vector.broadcast %22 : vector<1x384xf32> to vector<8x384xf32>
    %66 = arith.mulf %64, %65 : vector<8x384xf32>
    %67 = arith.mulf %66, %66 : vector<8x384xf32>
    %cst_21 = arith.constant dense<0.000000e+00> : vector<8xf32>
    %68 = vector.multi_reduction <add>, %67, %cst_21 [1] : vector<8x384xf32> to vector<8xf32>
    %69 = vector.shape_cast %68 : vector<8xf32> to vector<8x1xf32>
    %cst_22 = arith.constant 3.906250e-03 : f32
    %70 = vector.broadcast %cst_22 : f32 to vector<8x1xf32>
    %71 = arith.mulf %69, %70 : vector<8x1xf32>
    %72 = vector.broadcast %62 : vector<8x1xf32> to vector<8x384xf32>
    %73 = arith.subf %56, %72 : vector<8x384xf32>
    %cst_23 = arith.constant 9.99999974E-6 : f32
    %74 = vector.broadcast %cst_23 : f32 to vector<8x1xf32>
    %75 = arith.addf %71, %74 : vector<8x1xf32>
    %76 = math.rsqrt %75 : vector<8x1xf32>
    %77 = vector.broadcast %76 : vector<8x1xf32> to vector<8x384xf32>
    %78 = arith.mulf %73, %77 : vector<8x384xf32>
    %cst_24 = arith.constant 0.000000e+00 : f32
    %79 = vector.broadcast %cst_24 : f32 to vector<8x384xf32>
    %80 = arith.maximumf %78, %79 : vector<8x384xf32>
    %c348_i32_25 = arith.constant 348 : i32
    %81 = tpu.dynamic_rotate %80 by %c348_i32_25 dim 1 : vector<8x384xf32>, i32 -> vector<8x384xf32>
    %82 = vector.shape_cast %3 : vector<1x384xi1> to vector<1x384xi1>
    %83 = vector.broadcast %82 : vector<1x384xi1> to vector<8x384xi1>
    %84 = arith.select %83, %81, %80 : vector<8x384xi1>, vector<8x384xf32>
    %c36_i32_26 = arith.constant 36 : i32
    %85 = tpu.dynamic_rotate %84 by %c36_i32_26 dim 1 : vector<8x384xf32>, i32 -> vector<8x384xf32>
    %86 = vector.shape_cast %5 : vector<1x384xi1> to vector<1x384xi1>
    %87 = vector.broadcast %86 : vector<1x384xi1> to vector<8x384xi1>
    %88 = arith.select %87, %85, %84 : vector<8x384xi1>, vector<8x384xf32>
    %c382_i32_27 = arith.constant 382 : i32
    %89 = tpu.dynamic_rotate %88 by %c382_i32_27 dim 1 : vector<8x384xf32>, i32 -> vector<8x384xf32>
    %90 = vector.shape_cast %7 : vector<1x384xi1> to vector<1x384xi1>
    %91 = vector.broadcast %90 : vector<1x384xi1> to vector<8x384xi1>
    %92 = arith.select %91, %89, %88 : vector<8x384xi1>, vector<8x384xf32>
    %c2_i32_28 = arith.constant 2 : i32
    %93 = tpu.dynamic_rotate %92 by %c2_i32_28 dim 1 : vector<8x384xf32>, i32 -> vector<8x384xf32>
    %94 = vector.shape_cast %9 : vector<1x384xi1> to vector<1x384xi1>
    %95 = vector.broadcast %94 : vector<1x384xi1> to vector<8x384xi1>
    %96 = arith.select %95, %93, %92 : vector<8x384xi1>, vector<8x384xf32>
    %c19_i32_29 = arith.constant 19 : i32
    %97 = tpu.dynamic_rotate %96 by %c19_i32_29 dim 1 : vector<8x384xf32>, i32 -> vector<8x384xf32>
    %c18_i32_30 = arith.constant 18 : i32
    %98 = tpu.dynamic_rotate %96 by %c18_i32_30 dim 1 : vector<8x384xf32>, i32 -> vector<8x384xf32>
    %c17_i32_31 = arith.constant 17 : i32
    %99 = tpu.dynamic_rotate %96 by %c17_i32_31 dim 1 : vector<8x384xf32>, i32 -> vector<8x384xf32>
    %c1_i32_32 = arith.constant 1 : i32
    %100 = tpu.dynamic_rotate %96 by %c1_i32_32 dim 1 : vector<8x384xf32>, i32 -> vector<8x384xf32>
    %c383_i32_33 = arith.constant 383 : i32
    %101 = tpu.dynamic_rotate %96 by %c383_i32_33 dim 1 : vector<8x384xf32>, i32 -> vector<8x384xf32>
    %c367_i32_34 = arith.constant 367 : i32
    %102 = tpu.dynamic_rotate %96 by %c367_i32_34 dim 1 : vector<8x384xf32>, i32 -> vector<8x384xf32>
    %c366_i32_35 = arith.constant 366 : i32
    %103 = tpu.dynamic_rotate %96 by %c366_i32_35 dim 1 : vector<8x384xf32>, i32 -> vector<8x384xf32>
    %c365_i32_36 = arith.constant 365 : i32
    %104 = tpu.dynamic_rotate %96 by %c365_i32_36 dim 1 : vector<8x384xf32>, i32 -> vector<8x384xf32>
    %105 = tpu.concatenate %97, %98, %99, %100, %96, %101, %102, %103, %104 in 0 : vector<8x384xf32>, vector<8x384xf32>, vector<8x384xf32>, vector<8x384xf32>, vector<8x384xf32>, vector<8x384xf32>, vector<8x384xf32>, vector<8x384xf32>, vector<8x384xf32> -> vector<72x384xf32>
    %cst_37 = arith.constant dense<0.000000e+00> : vector<8x384xf32>
    %106 = tpu.matmul %24, %105, %cst_37 {dimension_numbers = #tpu.dot_dimension_numbers<[1], [0], [0], [1], [0, 0, 1, 1], [], []>} : vector<8x72xf32>, vector<72x384xf32>, vector<8x384xf32> -> vector<8x384xf32>
    %107 = vector.broadcast %26 : vector<8x1xf32> to vector<8x384xf32>
    %108 = arith.addf %106, %107 : vector<8x384xf32>
    %109 = vector.broadcast %22 : vector<1x384xf32> to vector<8x384xf32>
    %110 = arith.mulf %108, %109 : vector<8x384xf32>
    %cst_38 = arith.constant dense<0.000000e+00> : vector<8xf32>
    %111 = vector.multi_reduction <add>, %110, %cst_38 [1] : vector<8x384xf32> to vector<8xf32>
    %112 = vector.shape_cast %111 : vector<8xf32> to vector<8x1xf32>
    %cst_39 = arith.constant 3.906250e-03 : f32
    %113 = vector.broadcast %cst_39 : f32 to vector<8x1xf32>
    %114 = arith.mulf %112, %113 : vector<8x1xf32>
    %115 = vector.broadcast %114 : vector<8x1xf32> to vector<8x384xf32>
    %116 = arith.subf %108, %115 : vector<8x384xf32>
    %117 = vector.broadcast %22 : vector<1x384xf32> to vector<8x384xf32>
    %118 = arith.mulf %116, %117 : vector<8x384xf32>
    %119 = arith.mulf %118, %118 : vector<8x384xf32>
    %cst_40 = arith.constant dense<0.000000e+00> : vector<8xf32>
    %120 = vector.multi_reduction <add>, %119, %cst_40 [1] : vector<8x384xf32> to vector<8xf32>
    %121 = vector.shape_cast %120 : vector<8xf32> to vector<8x1xf32>
    %cst_41 = arith.constant 3.906250e-03 : f32
    %122 = vector.broadcast %cst_41 : f32 to vector<8x1xf32>
    %123 = arith.mulf %121, %122 : vector<8x1xf32>
    %124 = vector.broadcast %114 : vector<8x1xf32> to vector<8x384xf32>
    %125 = arith.subf %108, %124 : vector<8x384xf32>
    %cst_42 = arith.constant 9.99999974E-6 : f32
    %126 = vector.broadcast %cst_42 : f32 to vector<8x1xf32>
    %127 = arith.addf %123, %126 : vector<8x1xf32>
    %128 = math.rsqrt %127 : vector<8x1xf32>
    %129 = vector.broadcast %128 : vector<8x1xf32> to vector<8x384xf32>
    %130 = arith.mulf %125, %129 : vector<8x384xf32>
    %131 = arith.addf %44, %130 : vector<8x384xf32>
    %c0_43 = arith.constant 0 : index
    %c0_44 = arith.constant 0 : index
    %c0_45 = arith.constant 0 : index
    %132 = vector.load %arg7[%c0_43, %c0_44, %c0_45] : memref<1x8x384xf32, #tpu.memory_space<vmem>>, vector<1x8x384xf32>
    %133 = vector.shape_cast %132 : vector<1x8x384xf32> to vector<8x384xf32>
    %134 = vector.shape_cast %131 : vector<8x384xf32> to vector<1x8x384xf32>
    tpu.vector_store %arg7[%c0_43, %c0_44, %c0_45], %134 {strides = array<i32>} : memref<1x8x384xf32, #tpu.memory_space<vmem>>, vector<1x8x384xf32>,
    return
  }
  func.func @transform_0(%arg0: i32) -> (i32, i32, i32) {
    %c0_i32 = arith.constant 0 : i32
    %c0_i32_0 = arith.constant 0 : i32
    %c0_i32_1 = arith.constant 0 : i32
    return %arg0, %c0_i32, %c0_i32_0 : i32, i32, i32
  }
  func.func @transform_1(%arg0: i32) -> (i32, i32) {
    %c0_i32 = arith.constant 0 : i32
    %c0_i32_0 = arith.constant 0 : i32
    %c0_i32_1 = arith.constant 0 : i32
    return %c0_i32, %c0_i32_0 : i32, i32
  }
  func.func @transform_2(%arg0: i32) -> (i32, i32) {
    %c0_i32 = arith.constant 0 : i32
    %c0_i32_0 = arith.constant 0 : i32
    %c0_i32_1 = arith.constant 0 : i32
    return %c0_i32, %c0_i32_0 : i32, i32
  }
  func.func @transform_3(%arg0: i32) -> (i32, i32) {
    %c0_i32 = arith.constant 0 : i32
    %c0_i32_0 = arith.constant 0 : i32
    %c0_i32_1 = arith.constant 0 : i32
    return %c0_i32, %c0_i32_0 : i32, i32
  }
  func.func @transform_4(%arg0: i32) -> (i32, i32) {
    %c0_i32 = arith.constant 0 : i32
    %c0_i32_0 = arith.constant 0 : i32
    %c0_i32_1 = arith.constant 0 : i32
    return %c0_i32, %c0_i32_0 : i32, i32
  }
  func.func @transform_5(%arg0: i32) -> (i32, i32) {
    %c0_i32 = arith.constant 0 : i32
    %c0_i32_0 = arith.constant 0 : i32
    %c0_i32_1 = arith.constant 0 : i32
    return %c0_i32, %c0_i32_0 : i32, i32
  }
  func.func @transform_6(%arg0: i32) -> (i32, i32, i32) {
    %c0_i32 = arith.constant 0 : i32
    %c0_i32_0 = arith.constant 0 : i32
    %c0_i32_1 = arith.constant 0 : i32
    return %arg0, %c0_i32, %c0_i32_0 : i32, i32, i32
  }
}

module attributes {stable_mosaic.version = 11 : i64} {
  func.func @residual_block_kernel(%arg0: i32, %arg1: memref<1x8x384xf32, #tpu.memory_space<vmem>>, %arg2: memref<2x384xi32, #tpu.memory_space<vmem>>, %arg3: memref<8x72xf32, #tpu.memory_space<vmem>>, %arg4: memref<8x1xf32, #tpu.memory_space<vmem>>, %arg5: memref<8x72xf32, #tpu.memory_space<vmem>>, %arg6: memref<8x1xf32, #tpu.memory_space<vmem>>, %arg7: memref<1x8x384xf32, #tpu.memory_space<vmem>>) attributes {dimension_semantics = [#tpu.dimension_semantics<parallel>], iteration_bounds = array<i64: 2>, scalar_prefetch = 0 : i64, scratch_operands = 0 : i64, tpu.core_type = #tpu.core_type<tc>, window_params = [{transform_indices = @transform_0, window_bounds = array<i64: 1, 8, 384>}, {pipeline_mode = #tpu.pipeline_mode<synchronous>, transform_indices = @transform_1, window_bounds = array<i64: 2, 384>}, {pipeline_mode = #tpu.pipeline_mode<synchronous>, transform_indices = @transform_2, window_bounds = array<i64: 8, 72>}, {pipeline_mode = #tpu.pipeline_mode<synchronous>, transform_indices = @transform_3, window_bounds = array<i64: 8, 1>}, {pipeline_mode = #tpu.pipeline_mode<synchronous>, transform_indices = @transform_4, window_bounds = array<i64: 8, 72>}, {pipeline_mode = #tpu.pipeline_mode<synchronous>, transform_indices = @transform_5, window_bounds = array<i64: 8, 1>}, {transform_indices = @transform_6, window_bounds = array<i64: 1, 8, 384>}]} {
    %c0 = arith.constant 0 : index
    %c0_0 = arith.constant 0 : index
    %0 = vector.load %arg2[%c0, %c0_0] : memref<2x384xi32, #tpu.memory_space<vmem>>, vector<1x384xi32>
    %c1 = arith.constant 1 : index
    %c0_1 = arith.constant 0 : index
    %1 = vector.load %arg2[%c1, %c0_1] : memref<2x384xi32, #tpu.memory_space<vmem>>, vector<1x384xi32>
    %c0_i32 = arith.constant 0 : i32
    %2 = vector.broadcast %c0_i32 : i32 to vector<1x384xi32>
    %3 = arith.cmpi eq, %0, %2 : vector<1x384xi32>
    %c17_i32 = arith.constant 17 : i32
    %4 = vector.broadcast %c17_i32 : i32 to vector<1x384xi32>
    %5 = arith.cmpi eq, %0, %4 : vector<1x384xi32>
    %c0_i32_2 = arith.constant 0 : i32
    %6 = vector.broadcast %c0_i32_2 : i32 to vector<1x384xi32>
    %7 = arith.cmpi eq, %1, %6 : vector<1x384xi32>
    %c17_i32_3 = arith.constant 17 : i32
    %8 = vector.broadcast %c17_i32_3 : i32 to vector<1x384xi32>
    %9 = arith.cmpi eq, %1, %8 : vector<1x384xi32>
    %c1_i32 = arith.constant 1 : i32
    %10 = vector.broadcast %c1_i32 : i32 to vector<1x384xi32>
    %11 = arith.cmpi sge, %0, %10 : vector<1x384xi32>
    %c16_i32 = arith.constant 16 : i32
    %12 = vector.broadcast %c16_i32 : i32 to vector<1x384xi32>
    %13 = arith.cmpi sle, %0, %12 : vector<1x384xi32>
    %14 = arith.andi %11, %13 : vector<1x384xi1>
    %c1_i32_4 = arith.constant 1 : i32
    %15 = vector.broadcast %c1_i32_4 : i32 to vector<1x384xi32>
    %16 = arith.cmpi sge, %1, %15 : vector<1x384xi32>
    %17 = arith.andi %14, %16 : vector<1x384xi1>
    %c16_i32_5 = arith.constant 16 : i32
    %18 = vector.broadcast %c16_i32_5 : i32 to vector<1x384xi32>
    %19 = arith.cmpi sle, %1, %18 : vector<1x384xi32>
    %20 = arith.andi %17, %19 : vector<1x384xi1>
    %21 = arith.extui %20 : vector<1x384xi1> to vector<1x384xi32>
    %22 = arith.sitofp %21 : vector<1x384xi32> to vector<1x384xf32>
    %c0_6 = arith.constant 0 : index
    %c0_7 = arith.constant 0 : index
    %23 = vector.load %arg3[%c0_6, %c0_7] : memref<8x72xf32, #tpu.memory_space<vmem>>, vector<8x72xf32>
    %c0_8 = arith.constant 0 : index
    %c0_9 = arith.constant 0 : index
    %24 = vector.load %arg5[%c0_8, %c0_9] : memref<8x72xf32, #tpu.memory_space<vmem>>, vector<8x72xf32>
    %c0_10 = arith.constant 0 : index
    %c0_11 = arith.constant 0 : index
    %25 = vector.load %arg4[%c0_10, %c0_11] : memref<8x1xf32, #tpu.memory_space<vmem>>, vector<8x1xf32>
    %c0_12 = arith.constant 0 : index
    %c0_13 = arith.constant 0 : index
    %26 = vector.load %arg6[%c0_12, %c0_13] : memref<8x1xf32, #tpu.memory_space<vmem>>, vector<8x1xf32>
    %c0_14 = arith.constant 0 : index
    %c0_15 = arith.constant 0 : index
    %c0_16 = arith.constant 0 : index
    %27 = vector.load %arg1[%c0_14, %c0_15, %c0_16] : memref<1x8x384xf32, #tpu.memory_space<vmem>>, vector<1x8x384xf32>
    %28 = vector.shape_cast %27 : vector<1x8x384xf32> to vector<8x384xf32>
    %c348_i32 = arith.constant 348 : i32
    %29 = tpu.dynamic_rotate %28 by %c348_i32 dim 1 : vector<8x384xf32>, i32 -> vector<8x384xf32>
    %30 = vector.shape_cast %3 : vector<1x384xi1> to vector<1x384xi1>
    %31 = vector.broadcast %30 : vector<1x384xi1> to vector<8x384xi1>
    %32 = arith.select %31, %29, %28 : vector<8x384xi1>, vector<8x384xf32>
    %c36_i32 = arith.constant 36 : i32
    %33 = tpu.dynamic_rotate %32 by %c36_i32 dim 1 : vector<8x384xf32>, i32 -> vector<8x384xf32>
    %34 = vector.shape_cast %5 : vector<1x384xi1> to vector<1x384xi1>
    %35 = vector.broadcast %34 : vector<1x384xi1> to vector<8x384xi1>
    %36 = arith.select %35, %33, %32 : vector<8x384xi1>, vector<8x384xf32>
    %c382_i32 = arith.constant 382 : i32
    %37 = tpu.dynamic_rotate %36 by %c382_i32 dim 1 : vector<8x384xf32>, i32 -> vector<8x384xf32>
    %38 = vector.shape_cast %7 : vector<1x384xi1> to vector<1x384xi1>
    %39 = vector.broadcast %38 : vector<1x384xi1> to vector<8x384xi1>
    %40 = arith.select %39, %37, %36 : vector<8x384xi1>, vector<8x384xf32>
    %c2_i32 = arith.constant 2 : i32
    %41 = tpu.dynamic_rotate %40 by %c2_i32 dim 1 : vector<8x384xf32>, i32 -> vector<8x384xf32>
    %42 = vector.shape_cast %9 : vector<1x384xi1> to vector<1x384xi1>
    %43 = vector.broadcast %42 : vector<1x384xi1> to vector<8x384xi1>
    %44 = arith.select %43, %41, %40 : vector<8x384xi1>, vector<8x384xf32>
    %c19_i32 = arith.constant 19 : i32
    %45 = tpu.dynamic_rotate %44 by %c19_i32 dim 1 : vector<8x384xf32>, i32 -> vector<8x384xf32>
    %c18_i32 = arith.constant 18 : i32
    %46 = tpu.dynamic_rotate %44 by %c18_i32 dim 1 : vector<8x384xf32>, i32 -> vector<8x384xf32>
    %c17_i32_17 = arith.constant 17 : i32
    %47 = tpu.dynamic_rotate %44 by %c17_i32_17 dim 1 : vector<8x384xf32>, i32 -> vector<8x384xf32>
    %c1_i32_18 = arith.constant 1 : i32
    %48 = tpu.dynamic_rotate %44 by %c1_i32_18 dim 1 : vector<8x384xf32>, i32 -> vector<8x384xf32>
    %c383_i32 = arith.constant 383 : i32
    %49 = tpu.dynamic_rotate %44 by %c383_i32 dim 1 : vector<8x384xf32>, i32 -> vector<8x384xf32>
    %c367_i32 = arith.constant 367 : i32
    %50 = tpu.dynamic_rotate %44 by %c367_i32 dim 1 : vector<8x384xf32>, i32 -> vector<8x384xf32>
    %c366_i32 = arith.constant 366 : i32
    %51 = tpu.dynamic_rotate %44 by %c366_i32 dim 1 : vector<8x384xf32>, i32 -> vector<8x384xf32>
    %c365_i32 = arith.constant 365 : i32
    %52 = tpu.dynamic_rotate %44 by %c365_i32 dim 1 : vector<8x384xf32>, i32 -> vector<8x384xf32>
    %53 = tpu.concatenate %45, %46, %47, %48, %44, %49, %50, %51, %52 in 0 : vector<8x384xf32>, vector<8x384xf32>, vector<8x384xf32>, vector<8x384xf32>, vector<8x384xf32>, vector<8x384xf32>, vector<8x384xf32>, vector<8x384xf32>, vector<8x384xf32> -> vector<72x384xf32>
    %cst = arith.constant dense<0.000000e+00> : vector<8x384xf32>
    %54 = tpu.matmul %23, %53, %cst {dimension_numbers = #tpu.dot_dimension_numbers<[1], [0], [0], [1], [0, 0, 1, 1], [], []>} : vector<8x72xf32>, vector<72x384xf32>, vector<8x384xf32> -> vector<8x384xf32>
    %55 = vector.broadcast %25 : vector<8x1xf32> to vector<8x384xf32>
    %56 = arith.addf %54, %55 : vector<8x384xf32>
    %57 = vector.broadcast %22 : vector<1x384xf32> to vector<8x384xf32>
    %58 = arith.mulf %56, %57 : vector<8x384xf32>
    %cst_19 = arith.constant dense<0.000000e+00> : vector<8xf32>
    %59 = vector.multi_reduction <add>, %58, %cst_19 [1] : vector<8x384xf32> to vector<8xf32>
    %60 = vector.shape_cast %59 : vector<8xf32> to vector<8x1xf32>
    %cst_20 = arith.constant 3.906250e-03 : f32
    %61 = vector.broadcast %cst_20 : f32 to vector<8x1xf32>
    %62 = arith.mulf %60, %61 : vector<8x1xf32>
    %63 = vector.broadcast %62 : vector<8x1xf32> to vector<8x384xf32>
    %64 = arith.subf %56, %63 : vector<8x384xf32>
    %65 = vector.broadcast %22 : vector<1x384xf32> to vector<8x384xf32>
    %66 = arith.mulf %64, %65 : vector<8x384xf32>
    %67 = arith.mulf %66, %66 : vector<8x384xf32>
    %cst_21 = arith.constant dense<0.000000e+00> : vector<8xf32>
    %68 = vector.multi_reduction <add>, %67, %cst_21 [1] : vector<8x384xf32> to vector<8xf32>
    %69 = vector.shape_cast %68 : vector<8xf32> to vector<8x1xf32>
    %cst_22 = arith.constant 3.906250e-03 : f32
    %70 = vector.broadcast %cst_22 : f32 to vector<8x1xf32>
    %71 = arith.mulf %69, %70 : vector<8x1xf32>
    %72 = vector.broadcast %62 : vector<8x1xf32> to vector<8x384xf32>
    %73 = arith.subf %56, %72 : vector<8x384xf32>
    %cst_23 = arith.constant 9.99999974E-6 : f32
    %74 = vector.broadcast %cst_23 : f32 to vector<8x1xf32>
    %75 = arith.addf %71, %74 : vector<8x1xf32>
    %76 = math.rsqrt %75 : vector<8x1xf32>
    %77 = vector.broadcast %76 : vector<8x1xf32> to vector<8x384xf32>
    %78 = arith.mulf %73, %77 : vector<8x384xf32>
    %cst_24 = arith.constant 0.000000e+00 : f32
    %79 = vector.broadcast %cst_24 : f32 to vector<8x384xf32>
    %80 = arith.maximumf %78, %79 : vector<8x384xf32>
    %c348_i32_25 = arith.constant 348 : i32
    %81 = tpu.dynamic_rotate %80 by %c348_i32_25 dim 1 : vector<8x384xf32>, i32 -> vector<8x384xf32>
    %82 = vector.shape_cast %3 : vector<1x384xi1> to vector<1x384xi1>
    %83 = vector.broadcast %82 : vector<1x384xi1> to vector<8x384xi1>
    %84 = arith.select %83, %81, %80 : vector<8x384xi1>, vector<8x384xf32>
    %c36_i32_26 = arith.constant 36 : i32
    %85 = tpu.dynamic_rotate %84 by %c36_i32_26 dim 1 : vector<8x384xf32>, i32 -> vector<8x384xf32>
    %86 = vector.shape_cast %5 : vector<1x384xi1> to vector<1x384xi1>
    %87 = vector.broadcast %86 : vector<1x384xi1> to vector<8x384xi1>
    %88 = arith.select %87, %85, %84 : vector<8x384xi1>, vector<8x384xf32>
    %c382_i32_27 = arith.constant 382 : i32
    %89 = tpu.dynamic_rotate %88 by %c382_i32_27 dim 1 : vector<8x384xf32>, i32 -> vector<8x384xf32>
    %90 = vector.shape_cast %7 : vector<1x384xi1> to vector<1x384xi1>
    %91 = vector.broadcast %90 : vector<1x384xi1> to vector<8x384xi1>
    %92 = arith.select %91, %89, %88 : vector<8x384xi1>, vector<8x384xf32>
    %c2_i32_28 = arith.constant 2 : i32
    %93 = tpu.dynamic_rotate %92 by %c2_i32_28 dim 1 : vector<8x384xf32>, i32 -> vector<8x384xf32>
    %94 = vector.shape_cast %9 : vector<1x384xi1> to vector<1x384xi1>
    %95 = vector.broadcast %94 : vector<1x384xi1> to vector<8x384xi1>
    %96 = arith.select %95, %93, %92 : vector<8x384xi1>, vector<8x384xf32>
    %c19_i32_29 = arith.constant 19 : i32
    %97 = tpu.dynamic_rotate %96 by %c19_i32_29 dim 1 : vector<8x384xf32>, i32 -> vector<8x384xf32>
    %c18_i32_30 = arith.constant 18 : i32
    %98 = tpu.dynamic_rotate %96 by %c18_i32_30 dim 1 : vector<8x384xf32>, i32 -> vector<8x384xf32>
    %c17_i32_31 = arith.constant 17 : i32
    %99 = tpu.dynamic_rotate %96 by %c17_i32_31 dim 1 : vector<8x384xf32>, i32 -> vector<8x384xf32>
    %c1_i32_32 = arith.constant 1 : i32
    %100 = tpu.dynamic_rotate %96 by %c1_i32_32 dim 1 : vector<8x384xf32>, i32 -> vector<8x384xf32>
    %c383_i32_33 = arith.constant 383 : i32
    %101 = tpu.dynamic_rotate %96 by %c383_i32_33 dim 1 : vector<8x384xf32>, i32 -> vector<8x384xf32>
    %c367_i32_34 = arith.constant 367 : i32
    %102 = tpu.dynamic_rotate %96 by %c367_i32_34 dim 1 : vector<8x384xf32>, i32 -> vector<8x384xf32>
    %c366_i32_35 = arith.constant 366 : i32
    %103 = tpu.dynamic_rotate %96 by %c366_i32_35 dim 1 : vector<8x384xf32>, i32 -> vector<8x384xf32>
    %c365_i32_36 = arith.constant 365 : i32
    %104 = tpu.dynamic_rotate %96 by %c365_i32_36 dim 1 : vector<8x384xf32>, i32 -> vector<8x384xf32>
    %105 = tpu.concatenate %97, %98, %99, %100, %96, %101, %102, %103, %104 in 0 : vector<8x384xf32>, vector<8x384xf32>, vector<8x384xf32>, vector<8x384xf32>, vector<8x384xf32>, vector<8x384xf32>, vector<8x384xf32>, vector<8x384xf32>, vector<8x384xf32> -> vector<72x384xf32>
    %cst_37 = arith.constant dense<0.000000e+00> : vector<8x384xf32>
    %106 = tpu.matmul %24, %105, %cst_37 {dimension_numbers = #tpu.dot_dimension_numbers<[1], [0], [0], [1], [0, 0, 1, 1], [], []>} : vector<8x72xf32>, vector<72x384xf32>, vector<8x384xf32> -> vector<8x384xf32>
    %107 = vector.broadcast %26 : vector<8x1xf32> to vector<8x384xf32>
    %108 = arith.addf %106, %107 : vector<8x384xf32>
    %109 = vector.broadcast %22 : vector<1x384xf32> to vector<8x384xf32>
    %110 = arith.mulf %108, %109 : vector<8x384xf32>
    %cst_38 = arith.constant dense<0.000000e+00> : vector<8xf32>
    %111 = vector.multi_reduction <add>, %110, %cst_38 [1] : vector<8x384xf32> to vector<8xf32>
    %112 = vector.shape_cast %111 : vector<8xf32> to vector<8x1xf32>
    %cst_39 = arith.constant 3.906250e-03 : f32
    %113 = vector.broadcast %cst_39 : f32 to vector<8x1xf32>
    %114 = arith.mulf %112, %113 : vector<8x1xf32>
    %115 = vector.broadcast %114 : vector<8x1xf32> to vector<8x384xf32>
    %116 = arith.subf %108, %115 : vector<8x384xf32>
    %117 = vector.broadcast %22 : vector<1x384xf32> to vector<8x384xf32>
    %118 = arith.mulf %116, %117 : vector<8x384xf32>
    %119 = arith.mulf %118, %118 : vector<8x384xf32>
    %cst_40 = arith.constant dense<0.000000e+00> : vector<8xf32>
    %120 = vector.multi_reduction <add>, %119, %cst_40 [1] : vector<8x384xf32> to vector<8xf32>
    %121 = vector.shape_cast %120 : vector<8xf32> to vector<8x1xf32>
    %cst_41 = arith.constant 3.906250e-03 : f32
    %122 = vector.broadcast %cst_41 : f32 to vector<8x1xf32>
    %123 = arith.mulf %121, %122 : vector<8x1xf32>
    %124 = vector.broadcast %114 : vector<8x1xf32> to vector<8x384xf32>
    %125 = arith.subf %108, %124 : vector<8x384xf32>
    %cst_42 = arith.constant 9.99999974E-6 : f32
    %126 = vector.broadcast %cst_42 : f32 to vector<8x1xf32>
    %127 = arith.addf %123, %126 : vector<8x1xf32>
    %128 = math.rsqrt %127 : vector<8x1xf32>
    %129 = vector.broadcast %128 : vector<8x1xf32> to vector<8x384xf32>
    %130 = arith.mulf %125, %129 : vector<8x384xf32>
    %131 = arith.addf %44, %130 : vector<8x384xf32>
    %c0_43 = arith.constant 0 : index
    %c0_44 = arith.constant 0 : index
    %c0_45 = arith.constant 0 : index
    %132 = vector.load %arg7[%c0_43, %c0_44, %c0_45] : memref<1x8x384xf32, #tpu.memory_space<vmem>>, vector<1x8x384xf32>
    %133 = vector.shape_cast %132 : vector<1x8x384xf32> to vector<8x384xf32>
    %134 = vector.shape_cast %131 : vector<8x384xf32> to vector<1x8x384xf32>
    tpu.vector_store %arg7[%c0_43, %c0_44, %c0_45], %134 {strides = array<i32>} : memref<1x8x384xf32, #tpu.memory_space<vmem>>, vector<1x8x384xf32>,
    return
  }
  func.func @transform_0(%arg0: i32) -> (i32, i32, i32) {
    %c0_i32 = arith.constant 0 : i32
    %c0_i32_0 = arith.constant 0 : i32
    %c0_i32_1 = arith.constant 0 : i32
    return %arg0, %c0_i32, %c0_i32_0 : i32, i32, i32
  }
  func.func @transform_1(%arg0: i32) -> (i32, i32) {
    %c0_i32 = arith.constant 0 : i32
    %c0_i32_0 = arith.constant 0 : i32
    %c0_i32_1 = arith.constant 0 : i32
    return %c0_i32, %c0_i32_0 : i32, i32
  }
  func.func @transform_2(%arg0: i32) -> (i32, i32) {
    %c0_i32 = arith.constant 0 : i32
    %c0_i32_0 = arith.constant 0 : i32
    %c0_i32_1 = arith.constant 0 : i32
    return %c0_i32, %c0_i32_0 : i32, i32
  }
  func.func @transform_3(%arg0: i32) -> (i32, i32) {
    %c0_i32 = arith.constant 0 : i32
    %c0_i32_0 = arith.constant 0 : i32
    %c0_i32_1 = arith.constant 0 : i32
    return %c0_i32, %c0_i32_0 : i32, i32
  }
  func.func @transform_4(%arg0: i32) -> (i32, i32) {
    %c0_i32 = arith.constant 0 : i32
    %c0_i32_0 = arith.constant 0 : i32
    %c0_i32_1 = arith.constant 0 : i32
    return %c0_i32, %c0_i32_0 : i32, i32
  }
  func.func @transform_5(%arg0: i32) -> (i32, i32) {
    %c0_i32 = arith.constant 0 : i32
    %c0_i32_0 = arith.constant 0 : i32
    %c0_i32_1 = arith.constant 0 : i32
    return %c0_i32, %c0_i32_0 : i32, i32
  }
  func.func @transform_6(%arg0: i32) -> (i32, i32, i32) {
    %c0_i32 = arith.constant 0 : i32
    %c0_i32_0 = arith.constant 0 : i32
    %c0_i32_1 = arith.constant 0 : i32
    return %arg0, %c0_i32, %c0_i32_0 : i32, i32, i32
  }
}

</mosaic_0001>

<llo_original>
// kernel: tpu_custom_call.1
$region0: #{tpu_custom_call.1}
  #allocation0 [shape = 'u32[]', space=smem, size = 0x4, offset = 0x4, fixed_abs, tag = 'smem constant byte address 0x4 - core index']
  #allocation1 [shape = 'u32[144,128]{1,0:T(1,128)}', space=vmem, size = 0x12000, scoped, tag = 'internal scratch']
  %s0 = inlined_call_operand.hbm [shape: f32[2,8,384], index: 0, kind: input, shape index: {}]
  %s1 = inlined_call_operand.hbm [shape: s32[2,384], index: 1, kind: input, shape index: {}]
  %s2 = inlined_call_operand.vmem [shape: f32[8,72], index: 2, kind: input, shape index: {}]
  %s3 = inlined_call_operand.vmem [shape: f32[8,1], index: 3, kind: input, shape index: {}]
  %s4 = inlined_call_operand.vmem [shape: f32[8,72], index: 4, kind: input, shape index: {}]
  %s5 = inlined_call_operand.vmem [shape: f32[8,1], index: 5, kind: input, shape index: {}]
  %s6 = inlined_call_operand.hbm [shape: f32[2,8,384], index: 6, kind: output, shape index: {}]
  %s7 = sld [smem:[#allocation0]]
  $region65: #{tpu_custom_call.1} parent=0
    _
  %s9 = ssub.s32 1, %s7
  %s10 = scalar_select 0, %s9, %s7
  $region1: #{tpu_custom_call.1} parent=0
    #allocation2 [shape = 'u8[24576]{0}', space=vmem, size = 0x6000, scoped, tag = 'input window, operand 0']
    #allocation3 [shape = 's32[2]{0}', space=sflag, size = 0x8, scoped, tag = 'scoped memory for tpu_custom_call.1']
    #allocation4 [shape = 's32[2]{0}', space=sflag, size = 0x8, scoped, tag = 'scoped memory for tpu_custom_call.1']
    #allocation5 [shape = 'u8[3072]{0}', space=vmem, size = 0xc00, scoped, tag = 'input window, operand 1, single buffered']
    #allocation6 [shape = 's32[1]{0}', space=sflag, size = 0x4, scoped, tag = 'scoped memory for tpu_custom_call.1']
    #allocation7 [shape = 'u8[24576]{0}', space=vmem, size = 0x6000, scoped, tag = 'output window, operand 0']
    %11 = vsyncpa [#allocation3], 0
    %s12 = scalar_lea.sflag [#allocation3], 1
    %13 = vsyncpa %s12, 0
    %14 = vsyncpa [#allocation6], 0
    %15 = vsyncpa [#allocation4], 0
    %s16 = scalar_lea.sflag [#allocation4], 1
    %17 = vsyncpa %s16, 0
    loop: start=0, step=1, limit=4
    $region2: #{tpu_custom_call.1} parent=1 // loop_pre_header
      _
    $region3: #{tpu_custom_call.1} parent=1 // loop_header
      %s19 = sphi 0, %s23
      %p20 = scmp.ge.s32.totalorder %s19, 4
      %s29 = sphi 0, %s31
      %s32 = sphi 0, %s29
      %s33 = sphi 0, %s32
      %s49 = sphi 0, %s33
      %s53 = sphi 0, %s53
      %s55 = sphi 0, %s53
      %s56 = sphi 0, %s55
      %s70 = sphi 0, %s56
      %s74 = sphi 0, %s74
      %s76 = sphi 0, %s74
      %s77 = sphi 0, %s76
      %s91 = sphi 0, %s77
      %s95 = sphi 0, %s95
      %s97 = sphi 0, %s95
      %s98 = sphi 0, %s97
      %s112 = sphi 0, %s98
      %s116 = sphi 0, %s116
      %s118 = sphi 0, %s116
      %s119 = sphi 0, %s118
      %s133 = sphi 0, %s119
      %s137 = sphi 0, %s137
      %s139 = sphi 0, %s137
      %s140 = sphi 0, %s139
      %s154 = sphi 0, %s140
      %s160 = sphi 0, %s162
      %s163 = sphi 0, %s160
      %s164 = sphi 0, %s163
      %s180 = sphi 0, %s164
    $region4: #{tpu_custom_call.1} parent=1 // loop_header_branch
      %22 = sbr.rel (%p20) target = $region8
    $region5: #{tpu_custom_call.1} parent=1 // loop_body
      %s24 = ssub.s32 %s19, 1
      %s25 = ssub.s32 %s19, 2
      %s26 = sadd.s32 %s19, 1
      %s27 = ssub.s32 %s19, %s26
      %p28 = scmp.eq.s32.totalorder %s27, 0
      %s30 = sadd.s32 %s29, 1
      %s31 = scalar_select %p28, %s29, %s30
      %p34 = pneg %p28
      %p35 = scmp.eq.s32.totalorder %s19, 1
      %p36 = por %p34, %p35
      %p37 = scmp.ne.s32.totalorder %s29, %s32
      %p38 = scmp.eq.s32.totalorder %s19, 0
      %p39 = por %p37, %p38
      %p40 = scmp.ne.s32.totalorder %s29, %s32
      %p41 = scmp.eq.s32.totalorder %s24, 1
      %p42 = por %p40, %p41
      %p43 = scmp.ne.s32.totalorder %s32, %s33
      %p44 = scmp.eq.s32.totalorder %s24, 0
      %p45 = por %p43, %p44
      %p46 = scmp.ne.s32.totalorder %s32, %s33
      %p47 = scmp.eq.s32.totalorder %s25, 1
      %p48 = por %p46, %p47
      %p50 = scmp.ne.s32.totalorder %s33, %s49
      %p51 = scmp.eq.s32.totalorder %s25, 0
      %p52 = por %p50, %p51
      %s54 = sadd.s32 %s53, 1
      %p57 = scmp.eq.s32.totalorder %s19, 1
      %p58 = scmp.ne.s32.totalorder %s53, %s55
      %p59 = scmp.eq.s32.totalorder %s19, 0
      %p60 = por %p58, %p59
      %p61 = scmp.ne.s32.totalorder %s53, %s55
      %p62 = scmp.eq.s32.totalorder %s24, 1
      %p63 = por %p61, %p62
      %p64 = scmp.ne.s32.totalorder %s55, %s56
      %p65 = scmp.eq.s32.totalorder %s24, 0
      %p66 = por %p64, %p65
      %p67 = scmp.ne.s32.totalorder %s55, %s56
      %p68 = scmp.eq.s32.totalorder %s25, 1
      %p69 = por %p67, %p68
      %p71 = scmp.ne.s32.totalorder %s56, %s70
      %p72 = scmp.eq.s32.totalorder %s25, 0
      %p73 = por %p71, %p72
      %s75 = sadd.s32 %s74, 1
      %p78 = scmp.eq.s32.totalorder %s19, 1
      %p79 = scmp.ne.s32.totalorder %s74, %s76
      %p80 = scmp.eq.s32.totalorder %s19, 0
      %p81 = por %p79, %p80
      %p82 = scmp.ne.s32.totalorder %s74, %s76
      %p83 = scmp.eq.s32.totalorder %s24, 1
      %p84 = por %p82, %p83
      %p85 = scmp.ne.s32.totalorder %s76, %s77
      %p86 = scmp.eq.s32.totalorder %s24, 0
      %p87 = por %p85, %p86
      %p88 = scmp.ne.s32.totalorder %s76, %s77
      %p89 = scmp.eq.s32.totalorder %s25, 1
      %p90 = por %p88, %p89
      %p92 = scmp.ne.s32.totalorder %s77, %s91
      %p93 = scmp.eq.s32.totalorder %s25, 0
      %p94 = por %p92, %p93
      %s96 = sadd.s32 %s95, 1
      %p99 = scmp.eq.s32.totalorder %s19, 1
      %p100 = scmp.ne.s32.totalorder %s95, %s97
      %p101 = scmp.eq.s32.totalorder %s19, 0
      %p102 = por %p100, %p101
      %p103 = scmp.ne.s32.totalorder %s95, %s97
      %p104 = scmp.eq.s32.totalorder %s24, 1
      %p105 = por %p103, %p104
      %p106 = scmp.ne.s32.totalorder %s97, %s98
      %p107 = scmp.eq.s32.totalorder %s24, 0
      %p108 = por %p106, %p107
      %p109 = scmp.ne.s32.totalorder %s97, %s98
      %p110 = scmp.eq.s32.totalorder %s25, 1
      %p111 = por %p109, %p110
      %p113 = scmp.ne.s32.totalorder %s98, %s112
      %p114 = scmp.eq.s32.totalorder %s25, 0
      %p115 = por %p113, %p114
      %s117 = sadd.s32 %s116, 1
      %p120 = scmp.eq.s32.totalorder %s19, 1
      %p121 = scmp.ne.s32.totalorder %s116, %s118
      %p122 = scmp.eq.s32.totalorder %s19, 0
      %p123 = por %p121, %p122
      %p124 = scmp.ne.s32.totalorder %s116, %s118
      %p125 = scmp.eq.s32.totalorder %s24, 1
      %p126 = por %p124, %p125
      %p127 = scmp.ne.s32.totalorder %s118, %s119
      %p128 = scmp.eq.s32.totalorder %s24, 0
      %p129 = por %p127, %p128
      %p130 = scmp.ne.s32.totalorder %s118, %s119
      %p131 = scmp.eq.s32.totalorder %s25, 1
      %p132 = por %p130, %p131
      %p134 = scmp.ne.s32.totalorder %s119, %s133
      %p135 = scmp.eq.s32.totalorder %s25, 0
      %p136 = por %p134, %p135
      %s138 = sadd.s32 %s137, 1
      %p141 = scmp.eq.s32.totalorder %s19, 1
      %p142 = scmp.ne.s32.totalorder %s137, %s139
      %p143 = scmp.eq.s32.totalorder %s19, 0
      %p144 = por %p142, %p143
      %p145 = scmp.ne.s32.totalorder %s137, %s139
      %p146 = scmp.eq.s32.totalorder %s24, 1
      %p147 = por %p145, %p146
      %p148 = scmp.ne.s32.totalorder %s139, %s140
      %p149 = scmp.eq.s32.totalorder %s24, 0
      %p150 = por %p148, %p149
      %p151 = scmp.ne.s32.totalorder %s139, %s140
      %p152 = scmp.eq.s32.totalorder %s25, 1
      %p153 = por %p151, %p152
      %p155 = scmp.ne.s32.totalorder %s140, %s154
      %p156 = scmp.eq.s32.totalorder %s25, 0
      %p157 = por %p155, %p156
      %s158 = ssub.s32 %s19, %s26
      %p159 = scmp.eq.s32.totalorder %s158, 0
      %s161 = sadd.s32 %s160, 1
      %s162 = scalar_select %p159, %s160, %s161
      %p165 = pneg %p159
      %p166 = scmp.eq.s32.totalorder %s19, 1
      %p167 = por %p165, %p166
      %p168 = scmp.ne.s32.totalorder %s160, %s163
      %p169 = scmp.eq.s32.totalorder %s19, 0
      %p170 = por %p168, %p169
      %p171 = scmp.ne.s32.totalorder %s160, %s163
      %p172 = scmp.eq.s32.totalorder %s24, 1
      %p173 = por %p171, %p172
      %p174 = scmp.ne.s32.totalorder %s163, %s164
      %p175 = scmp.eq.s32.totalorder %s24, 0
      %p176 = por %p174, %p175
      %p177 = scmp.ne.s32.totalorder %s163, %s164
      %p178 = scmp.eq.s32.totalorder %s25, 1
      %p179 = por %p177, %p178
      %p181 = scmp.ne.s32.totalorder %s164, %s180
      %p182 = scmp.eq.s32.totalorder %s25, 0
      %p183 = por %p181, %p182
      %p184 = scmp.le.s32.totalorder 1, %s19
      %p185 = scmp.lt.s32.totalorder %s19, 3
      %p186 = pnand %p184, %p185
      %p187 = pneg %p186
      // Predicated region
      $region9: #{tpu_custom_call.1} parent=5 // pred_check
        _
      $region10: #{tpu_custom_call.1} parent=5 // pred_check_branch
        %189 = sbr.rel (%p186) target = $region12
      $region11: #{tpu_custom_call.1} parent=5 // pred_region
        %s190 = ssub.s32 %s19, 1
        // Predicated region
        $region13: #{tpu_custom_call.1} parent=11 // pred_check
          %p191 = pneg %p66
        $region14: #{tpu_custom_call.1} parent=11 // pred_check_branch
          %193 = sbr.rel (%p191) target = $region16
        $region15: #{tpu_custom_call.1} parent=11 // pred_region
          %s195 = ssub.s32 96, 96
          %196 = vsyncadd [#allocation6], %s195
          %s198 = sshll.u32 [#allocation5], 4
          %s199 = int_to_ptr.vmem [resolvable:$true] %s198
          %201 = dma.hbm_to_vmem [thread:$0]  %s1, 96, %s199, [#allocation6]
        $region16: #{tpu_custom_call.1} parent=11 // pred_fallthru
          _
        // Predicated region
        $region17: #{tpu_custom_call.1} parent=11 // pred_check
          %p202 = pneg %p87
        $region18: #{tpu_custom_call.1} parent=11 // pred_check_branch
          %204 = sbr.rel (%p202) target = $region20
        $region19: #{tpu_custom_call.1} parent=11 // pred_region
          _
        $region20: #{tpu_custom_call.1} parent=11 // pred_fallthru
          _
        // Predicated region
        $region21: #{tpu_custom_call.1} parent=11 // pred_check
          %p205 = pneg %p108
        $region22: #{tpu_custom_call.1} parent=11 // pred_check_branch
          %207 = sbr.rel (%p205) target = $region24
        $region23: #{tpu_custom_call.1} parent=11 // pred_region
          _
        $region24: #{tpu_custom_call.1} parent=11 // pred_fallthru
          _
        // Predicated region
        $region25: #{tpu_custom_call.1} parent=11 // pred_check
          %p208 = pneg %p129
        $region26: #{tpu_custom_call.1} parent=11 // pred_check_branch
          %210 = sbr.rel (%p208) target = $region28
        $region27: #{tpu_custom_call.1} parent=11 // pred_region
          _
        $region28: #{tpu_custom_call.1} parent=11 // pred_fallthru
          _
        // Predicated region
        $region29: #{tpu_custom_call.1} parent=11 // pred_check
          %p211 = pneg %p150
        $region30: #{tpu_custom_call.1} parent=11 // pred_check_branch
          %213 = sbr.rel (%p211) target = $region32
        $region31: #{tpu_custom_call.1} parent=11 // pred_region
          _
        $region32: #{tpu_custom_call.1} parent=11 // pred_fallthru
          _
      $region12: #{tpu_custom_call.1} parent=5 // pred_fallthru
        _
      %p214 = scmp.lt.s32.totalorder %s19, 2
      // Predicated region
      $region33: #{tpu_custom_call.1} parent=5 // pred_check
        %p215 = pneg %p214
      $region34: #{tpu_custom_call.1} parent=5 // pred_check_branch
        %217 = sbr.rel (%p215) target = $region36
      $region35: #{tpu_custom_call.1} parent=5 // pred_region
        // Predicated region
        $region37: #{tpu_custom_call.1} parent=35 // pred_check
          %p218 = pneg %p39
        $region38: #{tpu_custom_call.1} parent=35 // pred_check_branch
          %220 = sbr.rel (%p218) target = $region40
        $region39: #{tpu_custom_call.1} parent=35 // pred_region
          %s221 = sand.u32 %s29, 1
          %s222 = scalar_lea.sflag [#allocation3], %s221
          %s223 = sand.u32 %s29, 1
          %s224 = smul.addr %s223, 24
          %s225 = scalar_lea.vmem [#allocation2], %s224
          %s227 = ssub.s32 384, 384
          %228 = vsyncadd %s222, %s227
          %s229 = smul.addr %s19, 3
          %s230 = smul.addr %s229, 128
          %s231 = scalar_lea.hbm %s0, %s230
          %s233 = sshll.u32 %s225, 4
          %s234 = int_to_ptr.vmem [resolvable:$true] %s233
          %236 = dma.hbm_to_vmem [thread:$0]  %s231, 384, %s234, %s222
        $region40: #{tpu_custom_call.1} parent=35 // pred_fallthru
          _
      $region36: #{tpu_custom_call.1} parent=5 // pred_fallthru
        _
      %p237 = scmp.le.s32.totalorder 1, %s19
      %p238 = scmp.lt.s32.totalorder %s19, 3
      %p239 = pnand %p237, %p238
      %p240 = pneg %p239
      // Predicated region
      $region41: #{tpu_custom_call.1} parent=5 // pred_check
        _
      $region42: #{tpu_custom_call.1} parent=5 // pred_check_branch
        %242 = sbr.rel (%p239) target = $region44
      $region43: #{tpu_custom_call.1} parent=5 // pred_region
        %s243 = ssub.s32 %s19, 1
        %s244 = sand.u32 %s32, 1
        %s245 = scalar_lea.sflag [#allocation3], %s244
        %s246 = sand.u32 %s32, 1
        %s247 = smul.addr %s246, 24
        %s248 = scalar_lea.vmem [#allocation2], %s247
        // Predicated region
        $region45: #{tpu_custom_call.1} parent=43 // pred_check
          %p249 = pneg %p45
        $region46: #{tpu_custom_call.1} parent=43 // pred_check_branch
          %251 = sbr.rel (%p249) target = $region48
        $region47: #{tpu_custom_call.1} parent=43 // pred_region
          %252 = dma.done %s245, 384
        $region48: #{tpu_custom_call.1} parent=43 // pred_fallthru
          _
        // Predicated region
        $region49: #{tpu_custom_call.1} parent=43 // pred_check
          %p253 = pneg %p66
        $region50: #{tpu_custom_call.1} parent=43 // pred_check_branch
          %255 = sbr.rel (%p253) target = $region52
        $region51: #{tpu_custom_call.1} parent=43 // pred_region
          %256 = dma.done [#allocation6], 96
        $region52: #{tpu_custom_call.1} parent=43 // pred_fallthru
          _
        %s257 = sand.u32 %s32, 1
        %s258 = scalar_lea.sflag [#allocation3], %s257
        %s259 = sand.u32 %s32, 1
        %s260 = smul.addr %s259, 24
        %s261 = scalar_lea.vmem [#allocation2], %s260
        %p262 = pneg %p45
        %p263 = pneg %p42
        %p264 = pneg %p66
        %p265 = pneg %p63
        %p266 = pneg %p87
        %p267 = pneg %p84
        %p268 = pneg %p108
        %p269 = pneg %p105
        %p270 = pneg %p129
        %p271 = pneg %p126
        %p272 = pneg %p150
        %p273 = pneg %p147
        %p274 = pneg %p176
        %p275 = pneg %p173
        %s276 = sand.u32 %s163, 1
        %s277 = scalar_lea.sflag [#allocation4], %s276
        %s278 = sand.u32 %s163, 1
        %s279 = smul.addr %s278, 24
        %s280 = scalar_lea.vmem [#allocation7], %s279
        %v281 = vld [vmem:[#allocation5] ss:$2 sm:$0x7]
        %s282 = scalar_lea.vmem [#allocation5], 1
        %v283 = vld [vmem:[%s282] ss:$2 sm:$0x7]
        %vm284 = vcmp.eq.s32.totalorder %v281, 0
        %vm285 = vcmp.eq.s32.totalorder %v281, 17
        %vm286 = vcmp.eq.s32.totalorder %v283, 0
        %vm287 = vcmp.eq.s32.totalorder %v283, 17
        %vm288 = vcmp.ge.s32.totalorder %v281, 1
        %vm289 = vcmp.le.s32.totalorder %v281, 16
        %vm290 = vmand %vm288, %vm289
        %vm291 = vcmp.ge.s32.totalorder %v283, 1
        %vm292 = vmand %vm290, %vm291
        %vm293 = vcmp.le.s32.totalorder %v283, 16
        %vm294 = vmand %vm292, %vm293
        %v295 = vsel %vm294, 1, 0
        %v296 = vcvt.s32.f32 %v295
        %v297 = vld [vmem:[%s2] sm:$0xff]
        %v298 = vld [vmem:[%s4] sm:$0xff]
        %v299 = vld [vmem:[%s3] sm:$0xff]
        %v300 = vld [vmem:[%s5] sm:$0xff]
        %v301 = vld [vmem:[%s248] sm:$0xff]
        %v302 = vld [vmem:[%s248 + $0x8] sm:$0xff]
        %v303 = vld [vmem:[%s248 + $0x10] sm:$0xff]
        %304 = vrot.lane.b32.xlu0 %v301, 92
        %v305 = vpop.permute.xlu0 %304
        %306 = vrot.lane.b32.xlu0 %v302, 92
        %v307 = vpop.permute.xlu0 %306
        %308 = vrot.lane.b32.xlu0 %v303, 92
        %v309 = vpop.permute.xlu0 %308
        %v310 = vlaneseq
        %v311 = vand.u32 %v310, 127
        %vm312 = vcmp.lt.s32.totalorder %v311, 92
        %v313 = vsel %vm312, %v307, %v309
        %v314 = vsel %vm312, %v305, %v307
        %v315 = vsel %vm312, %v309, %v305
        %v316 = vsel %vm284, 1, 0
        %v317 = vlaneseq
        %v318 = vshrl.u32 %v317, 7
        %v319 = vsub.s32 0, %v318
        %v320 = vrot.slane %v316, %v319
        %v321 = vlaneseq
        %v322 = vshrl.u32 %v321, 7
        %v323 = vsub.s32 1, %v322
        %v324 = vrot.slane %v316, %v323
        %v325 = vlaneseq
        %v326 = vshrl.u32 %v325, 7
        %v327 = vsub.s32 2, %v326
        %v328 = vrot.slane %v316, %v327
        %vm329 = vcmp.eq.s32.totalorder %v320, 1
        %vm330 = vcmp.eq.s32.totalorder %v324, 1
        %vm331 = vcmp.eq.s32.totalorder %v328, 1
        %v332 = vsel %vm329, %v314, %v301
        %v333 = vsel %vm330, %v313, %v302
        %v334 = vsel %vm331, %v315, %v303
        %335 = vrot.lane.b32.xlu0 %v332, 36
        %v336 = vpop.permute.xlu0 %335
        %337 = vrot.lane.b32.xlu0 %v333, 36
        %v338 = vpop.permute.xlu0 %337
        %339 = vrot.lane.b32.xlu0 %v334, 36
        %v340 = vpop.permute.xlu0 %339
        %vm341 = vcmp.lt.s32.totalorder %v311, 36
        %v342 = vsel %vm341, %v338, %v340
        %v343 = vsel %vm341, %v336, %v338
        %v344 = vsel %vm341, %v340, %v336
        %v345 = vsel %vm285, 1, 0
        %v346 = vlaneseq
        %v347 = vshrl.u32 %v346, 7
        %v348 = vsub.s32 0, %v347
        %v349 = vrot.slane %v345, %v348
        %v350 = vlaneseq
        %v351 = vshrl.u32 %v350, 7
        %v352 = vsub.s32 1, %v351
        %v353 = vrot.slane %v345, %v352
        %v354 = vlaneseq
        %v355 = vshrl.u32 %v354, 7
        %v356 = vsub.s32 2, %v355
        %v357 = vrot.slane %v345, %v356
        %vm358 = vcmp.eq.s32.totalorder %v349, 1
        %vm359 = vcmp.eq.s32.totalorder %v353, 1
        %vm360 = vcmp.eq.s32.totalorder %v357, 1
        %v361 = vsel %vm358, %v344, %v332
        %v362 = vsel %vm359, %v343, %v333
        %v363 = vsel %vm360, %v342, %v334
        %364 = vrot.lane.b32.xlu0 %v361, 126
        %v365 = vpop.permute.xlu0 %364
        %366 = vrot.lane.b32.xlu0 %v362, 126
        %v367 = vpop.permute.xlu0 %366
        %368 = vrot.lane.b32.xlu0 %v363, 126
        %v369 = vpop.permute.xlu0 %368
        %vm370 = vcmp.lt.s32.totalorder %v311, 126
        %v371 = vsel %vm370, %v367, %v369
        %v372 = vsel %vm370, %v365, %v367
        %v373 = vsel %vm370, %v369, %v365
        %v374 = vsel %vm286, 1, 0
        %v375 = vlaneseq
        %v376 = vshrl.u32 %v375, 7
        %v377 = vsub.s32 0, %v376
        %v378 = vrot.slane %v374, %v377
        %v379 = vlaneseq
        %v380 = vshrl.u32 %v379, 7
        %v381 = vsub.s32 1, %v380
        %v382 = vrot.slane %v374, %v381
        %v383 = vlaneseq
        %v384 = vshrl.u32 %v383, 7
        %v385 = vsub.s32 2, %v384
        %v386 = vrot.slane %v374, %v385
        %vm387 = vcmp.eq.s32.totalorder %v378, 1
        %vm388 = vcmp.eq.s32.totalorder %v382, 1
        %vm389 = vcmp.eq.s32.totalorder %v386, 1
        %v390 = vsel %vm387, %v372, %v361
        %v391 = vsel %vm388, %v371, %v362
        %v392 = vsel %vm389, %v373, %v363
        %393 = vrot.lane.b32.xlu0 %v390, 2
        %v394 = vpop.permute.xlu0 %393
        %395 = vrot.lane.b32.xlu0 %v391, 2
        %v396 = vpop.permute.xlu0 %395
        %397 = vrot.lane.b32.xlu0 %v392, 2
        %v398 = vpop.permute.xlu0 %397
        %vm399 = vcmp.lt.s32.totalorder %v311, 2
        %v400 = vsel %vm399, %v396, %v398
        %v401 = vsel %vm399, %v394, %v396
        %v402 = vsel %vm399, %v398, %v394
        %v403 = vsel %vm287, 1, 0
        %v404 = vlaneseq
        %v405 = vshrl.u32 %v404, 7
        %v406 = vsub.s32 0, %v405
        %v407 = vrot.slane %v403, %v406
        %v408 = vlaneseq
        %v409 = vshrl.u32 %v408, 7
        %v410 = vsub.s32 1, %v409
        %v411 = vrot.slane %v403, %v410
        %v412 = vlaneseq
        %v413 = vshrl.u32 %v412, 7
        %v414 = vsub.s32 2, %v413
        %v415 = vrot.slane %v403, %v414
        %vm416 = vcmp.eq.s32.totalorder %v407, 1
        %vm417 = vcmp.eq.s32.totalorder %v411, 1
        %vm418 = vcmp.eq.s32.totalorder %v415, 1
        %v419 = vsel %vm416, %v402, %v390
        %v420 = vsel %vm417, %v401, %v391
        %v421 = vsel %vm418, %v400, %v392
        %422 = vrot.lane.b32.xlu0 %v419, 19
        %v423 = vpop.permute.xlu0 %422
        %424 = vrot.lane.b32.xlu0 %v420, 19
        %v425 = vpop.permute.xlu0 %424
        %426 = vrot.lane.b32.xlu0 %v421, 19
        %v427 = vpop.permute.xlu0 %426
        %vm428 = vcmp.lt.s32.totalorder %v311, 19
        %v429 = vsel %vm428, %v425, %v427
        %v430 = vsel %vm428, %v423, %v425
        %v431 = vsel %vm428, %v427, %v423
        %432 = vrot.lane.b32.xlu0 %v419, 18
        %v433 = vpop.permute.xlu0 %432
        %434 = vrot.lane.b32.xlu0 %v420, 18
        %v435 = vpop.permute.xlu0 %434
        %436 = vrot.lane.b32.xlu0 %v421, 18
        %v437 = vpop.permute.xlu0 %436
        %vm438 = vcmp.lt.s32.totalorder %v311, 18
        %v439 = vsel %vm438, %v435, %v437
        %v440 = vsel %vm438, %v433, %v435
        %v441 = vsel %vm438, %v437, %v433
        %442 = vrot.lane.b32.xlu0 %v419, 17
        %v443 = vpop.permute.xlu0 %442
        %444 = vrot.lane.b32.xlu0 %v420, 17
        %v445 = vpop.permute.xlu0 %444
        %446 = vrot.lane.b32.xlu0 %v421, 17
        %v447 = vpop.permute.xlu0 %446
        %vm448 = vcmp.lt.s32.totalorder %v311, 17
        %v449 = vsel %vm448, %v445, %v447
        %v450 = vsel %vm448, %v443, %v445
        %v451 = vsel %vm448, %v447, %v443
        %452 = vrot.lane.b32.xlu0 %v419, 1
        %v453 = vpop.permute.xlu0 %452
        %454 = vrot.lane.b32.xlu0 %v420, 1
        %v455 = vpop.permute.xlu0 %454
        %456 = vrot.lane.b32.xlu0 %v421, 1
        %v457 = vpop.permute.xlu0 %456
        %vm458 = vcmp.lt.s32.totalorder %v311, 1
        %v459 = vsel %vm458, %v455, %v457
        %v460 = vsel %vm458, %v453, %v455
        %v461 = vsel %vm458, %v457, %v453
        %462 = vrot.lane.b32.xlu0 %v419, 127
        %v463 = vpop.permute.xlu0 %462
        %464 = vrot.lane.b32.xlu0 %v420, 127
        %v465 = vpop.permute.xlu0 %464
        %466 = vrot.lane.b32.xlu0 %v421, 127
        %v467 = vpop.permute.xlu0 %466
        %vm468 = vcmp.lt.s32.totalorder %v311, 127
        %v469 = vsel %vm468, %v465, %v467
        %v470 = vsel %vm468, %v463, %v465
        %v471 = vsel %vm468, %v467, %v463
        %472 = vrot.lane.b32.xlu0 %v419, 111
        %v473 = vpop.permute.xlu0 %472
        %474 = vrot.lane.b32.xlu0 %v420, 111
        %v475 = vpop.permute.xlu0 %474
        %476 = vrot.lane.b32.xlu0 %v421, 111
        %v477 = vpop.permute.xlu0 %476
        %vm478 = vcmp.lt.s32.totalorder %v311, 111
        %v479 = vsel %vm478, %v475, %v477
        %v480 = vsel %vm478, %v473, %v475
        %v481 = vsel %vm478, %v477, %v473
        %482 = vrot.lane.b32.xlu0 %v419, 110
        %v483 = vpop.permute.xlu0 %482
        %484 = vrot.lane.b32.xlu0 %v420, 110
        %v485 = vpop.permute.xlu0 %484
        %486 = vrot.lane.b32.xlu0 %v421, 110
        %v487 = vpop.permute.xlu0 %486
        %vm488 = vcmp.lt.s32.totalorder %v311, 110
        %v489 = vsel %vm488, %v485, %v487
        %v490 = vsel %vm488, %v483, %v485
        %v491 = vsel %vm488, %v487, %v483
        %492 = vrot.lane.b32.xlu0 %v419, 109
        %v493 = vpop.permute.xlu0 %492
        %494 = vrot.lane.b32.xlu0 %v420, 109
        %v495 = vpop.permute.xlu0 %494
        %496 = vrot.lane.b32.xlu0 %v421, 109
        %v497 = vpop.permute.xlu0 %496
        %vm498 = vcmp.lt.s32.totalorder %v311, 109
        %v499 = vsel %vm498, %v495, %v497
        %v500 = vsel %vm498, %v493, %v495
        %v501 = vsel %vm498, %v497, %v493
        %503 = vset.pattern.permute.xlu0 0
        %504 = vperm.xlu0 %503, %v299
        %v505 = vpop.permute.xlu0 %504
        %vm507 = vcmask 588800
        %v509 = vsel %vm507, %v297, 0
        %511 = vmatprep.subr.mxu0 %v430
        %512 = vmatpush1.msra.mxu0 %v431
        %513 = vmatprep.subr.mxu0 %v440
        %514 = vmatpush1.msra.mxu0 %v441
        %515 = vmatprep.subr.mxu0 %v450
        %516 = vmatpush1.msra.mxu0 %v451
        %517 = vmatprep.subr.mxu0 %v460
        %518 = vmatpush1.msra.mxu0 %v461
        %519 = vmatprep.subr.mxu0 %v420
        %520 = vmatpush1.msra.mxu0 %v419
        %521 = vmatprep.subr.mxu0 %v469
        %522 = vmatpush1.msra.mxu0 %v470
        %523 = vmatprep.subr.mxu0 %v479
        %524 = vmatpush1.msra.mxu0 %v480
        %525 = vmatprep.subr.mxu0 %v489
        %526 = vmatpush1.msra.mxu0 %v490
        %527 = vmatprep.subr.mxu0 %v499
        %528 = vmatpush1.msra.mxu0 %v500
        %529 = vmatprep.subr.mxu0 0.0
        %530 = vmatpush1.msra.mxu0 0.0
        %531 = vmatprep.subr.mxu0 0.0
        %532 = vmatpush1.msra.mxu0 0.0
        %533 = vmatprep.subr.mxu0 0.0
        %534 = vmatpush1.msra.mxu0 0.0
        %535 = vmatprep.subr.mxu0 0.0
        %536 = vmatpush1.msra.mxu0 0.0
        %537 = vmatprep.subr.mxu0 0.0
        %538 = vmatpush1.msra.mxu0 0.0
        %539 = vmatprep.subr.mxu0 0.0
        %540 = vmatpush1.msra.mxu0 0.0
        %541 = vmatprep.subr.mxu0 0.0
        %542 = vmatpush1.msra.mxu0 0.0
        %543 = vmatprep.subr.mxu0 0.0
        %544 = vmatpush1.msra.mxu0 0.0
        %545 = vmatprep.subr.mxu0 0.0
        %546 = vmatpush1.msra.mxu0 0.0
        %547 = vmatprep.subr.mxu0 0.0
        %548 = vmatpush1.msra.mxu0 0.0
        %549 = vmatprep.subr.mxu0 0.0
        %550 = vmatpush1.msra.mxu0 0.0
        %551 = vmatprep.subr.mxu0 0.0
        %552 = vmatpush1.msra.mxu0 0.0
        %553 = vmatprep.subr.mxu0 0.0
        %554 = vmatpush1.msra.mxu0 0.0
        %555 = vmatprep.subr.mxu0 0.0
        %556 = vmatpush1.msra.mxu0 0.0
        %557 = vmatprep.subr.mxu0 0.0
        %558 = vmatpush1.msra.mxu0 0.0
        %559 = vmatprep.subr.mxu0 0.0
        %560 = vmatpush1.msra.mxu0 0.0
        %561 = vmatprep.subr.mxu0 0.0
        %562 = vmatpush1.msra.mxu0 0.0
        %563 = vmatprep.subr.mxu0 0.0
        %564 = vmatpush1.msra.mxu0 0.0
        %565 = vmatprep.subr.mxu0 0.0
        %566 = vmatpush1.msra.mxu0 0.0
        %567 = vmatprep.subr.mxu0 0.0
        %568 = vmatpush1.msra.mxu0 0.0
        %569 = vmatprep.subr.mxu0 0.0
        %570 = vmatpush1.msra.mxu0 0.0
        %571 = vmatprep.subr.mxu0 0.0
        %572 = vmatpush1.msra.mxu0 0.0
        %573 = vmatprep.subr.mxu0 0.0
        %574 = vmatpush1.msra.mxu0 0.0
        %575 = vmatprep.mubr.f32.mxu0 0.0
        %576 = vmatmul.mubr.f32.gmra.mrb[0].mxu0 %v509
        %v577 = vpop.f32.mrb[0].mxu0
        %v578 = vadd.f32 %v505, %v577
        %v579 = vpop.f32.mrb[0].mxu0
        %v580 = vadd.f32 %v505, %v579
        %581 = vdwg.mxu0
        %582 = vmatprep.subr.mxu0 0.0
        %583 = vmatpush1.msra.mxu0 %v429
        %584 = vmatprep.subr.mxu0 0.0
        %585 = vmatpush1.msra.mxu0 %v439
        %586 = vmatprep.subr.mxu0 0.0
        %587 = vmatpush1.msra.mxu0 %v449
        %588 = vmatprep.subr.mxu0 0.0
        %589 = vmatpush1.msra.mxu0 %v459
        %590 = vmatprep.subr.mxu0 0.0
        %591 = vmatpush1.msra.mxu0 %v421
        %592 = vmatprep.subr.mxu0 0.0
        %593 = vmatpush1.msra.mxu0 %v471
        %594 = vmatprep.subr.mxu0 0.0
        %595 = vmatpush1.msra.mxu0 %v481
        %596 = vmatprep.subr.mxu0 0.0
        %597 = vmatpush1.msra.mxu0 %v491
        %598 = vmatprep.subr.mxu0 0.0
        %599 = vmatpush1.msra.mxu0 %v501
        %600 = vmatprep.subr.mxu0 0.0
        %601 = vmatpush1.msra.mxu0 0.0
        %602 = vmatprep.subr.mxu0 0.0
        %603 = vmatpush1.msra.mxu0 0.0
        %604 = vmatprep.subr.mxu0 0.0
        %605 = vmatpush1.msra.mxu0 0.0
        %606 = vmatprep.subr.mxu0 0.0
        %607 = vmatpush1.msra.mxu0 0.0
        %608 = vmatprep.subr.mxu0 0.0
        %609 = vmatpush1.msra.mxu0 0.0
        %610 = vmatprep.subr.mxu0 0.0
        %611 = vmatpush1.msra.mxu0 0.0
        %612 = vmatprep.subr.mxu0 0.0
        %613 = vmatpush1.msra.mxu0 0.0
        %614 = vmatprep.subr.mxu0 0.0
        %615 = vmatpush1.msra.mxu0 0.0
        %616 = vmatprep.subr.mxu0 0.0
        %617 = vmatpush1.msra.mxu0 0.0
        %618 = vmatprep.subr.mxu0 0.0
        %619 = vmatpush1.msra.mxu0 0.0
        %620 = vmatprep.subr.mxu0 0.0
        %621 = vmatpush1.msra.mxu0 0.0
        %622 = vmatprep.subr.mxu0 0.0
        %623 = vmatpush1.msra.mxu0 0.0
        %624 = vmatprep.subr.mxu0 0.0
        %625 = vmatpush1.msra.mxu0 0.0
        %626 = vmatprep.subr.mxu0 0.0
        %627 = vmatpush1.msra.mxu0 0.0
        %628 = vmatprep.subr.mxu0 0.0
        %629 = vmatpush1.msra.mxu0 0.0
        %630 = vmatprep.subr.mxu0 0.0
        %631 = vmatpush1.msra.mxu0 0.0
        %632 = vmatprep.subr.mxu0 0.0
        %633 = vmatpush1.msra.mxu0 0.0
        %634 = vmatprep.subr.mxu0 0.0
        %635 = vmatpush1.msra.mxu0 0.0
        %636 = vmatprep.subr.mxu0 0.0
        %637 = vmatpush1.msra.mxu0 0.0
        %638 = vmatprep.subr.mxu0 0.0
        %639 = vmatpush1.msra.mxu0 0.0
        %640 = vmatprep.subr.mxu0 0.0
        %641 = vmatpush1.msra.mxu0 0.0
        %642 = vmatprep.subr.mxu0 0.0
        %643 = vmatpush1.msra.mxu0 0.0
        %644 = vmatprep.subr.mxu0 0.0
        %645 = vmatpush1.msra.mxu0 0.0
        %646 = vmatprep.mubr.f32.mxu0 0.0
        %647 = vmatmul.mubr.f32.gmra.mrb[0].mxu0 %v509
        %v648 = vpop.f32.mrb[0].mxu0
        %v649 = vadd.f32 %v505, %v648
        %v650 = vpop.f32.mrb[0].mxu0
        %651 = vdwg.mxu0
        %v653 = vlaneseq
        %v654 = vshrl.u32 %v653, 7
        %v655 = vsub.s32 0, %v654
        %v656 = vrot.slane %v296, %v655
        %v657 = vlaneseq
        %v658 = vshrl.u32 %v657, 7
        %v659 = vsub.s32 1, %v658
        %v660 = vrot.slane %v296, %v659
        %v661 = vlaneseq
        %v662 = vshrl.u32 %v661, 7
        %v663 = vsub.s32 2, %v662
        %v664 = vrot.slane %v296, %v663
        %v668 = vmul.f32 %v578, %v656
        %v669 = vmul.f32 %v580, %v660
        %v670 = vmul.f32 %v649, %v664
        %v671 = vadd.f32 %v668, %v669
        %v672 = vadd.f32 %v671, %v670
        %673 = vadd.xlane.f32.xlu0 %v672
        %v674 = vpop.xlane.xlu0 %673
        %v675 = vmul.f32 %v674, 0.00390625
        %v676 = vsub.f32 %v578, %v675
        %v677 = vsub.f32 %v580, %v675
        %v678 = vsub.f32 %v649, %v675
        %v679 = vmul.f32 %v676, %v656
        %v680 = vmul.f32 %v677, %v660
        %v681 = vmul.f32 %v678, %v664
        %v682 = vmul.f32 %v679, %v679
        %v683 = vmul.f32 %v680, %v680
        %v684 = vmul.f32 %v681, %v681
        %v685 = vadd.f32 %v682, %v683
        %v686 = vadd.f32 %v685, %v684
        %687 = vadd.xlane.f32.xlu0 %v686
        %v688 = vpop.xlane.xlu0 %687
        %v689 = vmul.f32 %v688, 0.00390625
        %v690 = vadd.f32 %v689, 1e-05
        %v691 = vrsqrt.pop %v690
        %v692 = vmul.f32 %v676, %v691
        %v693 = vmul.f32 %v677, %v691
        %v694 = vmul.f32 %v678, %v691
        %v695 = vmax.f32 %v692, 0.0
        %v696 = vmax.f32 %v693, 0.0
        %v697 = vmax.f32 %v694, 0.0
        %698 = vrot.lane.b32.xlu0 %v695, 92
        %v699 = vpop.permute.xlu0 %698
        %700 = vrot.lane.b32.xlu0 %v696, 92
        %v701 = vpop.permute.xlu0 %700
        %702 = vrot.lane.b32.xlu0 %v697, 92
        %v703 = vpop.permute.xlu0 %702
        %v704 = vsel %vm312, %v701, %v703
        %v705 = vsel %vm312, %v699, %v701
        %v706 = vsel %vm312, %v703, %v699
        %v707 = vsel %vm329, %v705, %v695
        %v708 = vsel %vm330, %v704, %v696
        %v709 = vsel %vm331, %v706, %v697
        %710 = vrot.lane.b32.xlu0 %v707, 36
        %v711 = vpop.permute.xlu0 %710
        %712 = vrot.lane.b32.xlu0 %v708, 36
        %v713 = vpop.permute.xlu0 %712
        %714 = vrot.lane.b32.xlu0 %v709, 36
        %v715 = vpop.permute.xlu0 %714
        %v716 = vsel %vm341, %v713, %v715
        %v717 = vsel %vm341, %v711, %v713
        %v718 = vsel %vm341, %v715, %v711
        %v719 = vsel %vm358, %v718, %v707
        %v720 = vsel %vm359, %v717, %v708
        %v721 = vsel %vm360, %v716, %v709
        %722 = vrot.lane.b32.xlu0 %v719, 126
        %v723 = vpop.permute.xlu0 %722
        %724 = vrot.lane.b32.xlu0 %v720, 126
        %v725 = vpop.permute.xlu0 %724
        %726 = vrot.lane.b32.xlu0 %v721, 126
        %v727 = vpop.permute.xlu0 %726
        %v728 = vsel %vm370, %v725, %v727
        %v729 = vsel %vm370, %v723, %v725
        %v730 = vsel %vm370, %v727, %v723
        %v731 = vsel %vm387, %v729, %v719
        %v732 = vsel %vm388, %v728, %v720
        %v733 = vsel %vm389, %v730, %v721
        %734 = vrot.lane.b32.xlu0 %v731, 2
        %v735 = vpop.permute.xlu0 %734
        %736 = vrot.lane.b32.xlu0 %v732, 2
        %v737 = vpop.permute.xlu0 %736
        %738 = vrot.lane.b32.xlu0 %v733, 2
        %v739 = vpop.permute.xlu0 %738
        %v740 = vsel %vm399, %v737, %v739
        %v741 = vsel %vm399, %v735, %v737
        %v742 = vsel %vm399, %v739, %v735
        %v743 = vsel %vm416, %v742, %v731
        %v744 = vsel %vm417, %v741, %v732
        %v745 = vsel %vm418, %v740, %v733
        %746 = vrot.lane.b32.xlu0 %v743, 19
        %v747 = vpop.permute.xlu0 %746
        %748 = vrot.lane.b32.xlu0 %v744, 19
        %v749 = vpop.permute.xlu0 %748
        %750 = vrot.lane.b32.xlu0 %v745, 19
        %v751 = vpop.permute.xlu0 %750
        %v752 = vsel %vm428, %v749, %v751
        %v753 = vsel %vm428, %v747, %v749
        %v754 = vsel %vm428, %v751, %v747
        %755 = vrot.lane.b32.xlu0 %v743, 18
        %v756 = vpop.permute.xlu0 %755
        %757 = vrot.lane.b32.xlu0 %v744, 18
        %v758 = vpop.permute.xlu0 %757
        %759 = vrot.lane.b32.xlu0 %v745, 18
        %v760 = vpop.permute.xlu0 %759
        %v761 = vsel %vm438, %v758, %v760
        %v762 = vsel %vm438, %v756, %v758
        %v763 = vsel %vm438, %v760, %v756
        %764 = vrot.lane.b32.xlu0 %v743, 17
        %v765 = vpop.permute.xlu0 %764
        %766 = vrot.lane.b32.xlu0 %v744, 17
        %v767 = vpop.permute.xlu0 %766
        %768 = vrot.lane.b32.xlu0 %v745, 17
        %v769 = vpop.permute.xlu0 %768
        %v770 = vsel %vm448, %v767, %v769
        %v771 = vsel %vm448, %v765, %v767
        %v772 = vsel %vm448, %v769, %v765
        %773 = vrot.lane.b32.xlu0 %v743, 1
        %v774 = vpop.permute.xlu0 %773
        %775 = vrot.lane.b32.xlu0 %v744, 1
        %v776 = vpop.permute.xlu0 %775
        %777 = vrot.lane.b32.xlu0 %v745, 1
        %v778 = vpop.permute.xlu0 %777
        %v779 = vsel %vm458, %v776, %v778
        %v780 = vsel %vm458, %v774, %v776
        %v781 = vsel %vm458, %v778, %v774
        %782 = vrot.lane.b32.xlu0 %v743, 127
        %v783 = vpop.permute.xlu0 %782
        %784 = vrot.lane.b32.xlu0 %v744, 127
        %v785 = vpop.permute.xlu0 %784
        %786 = vrot.lane.b32.xlu0 %v745, 127
        %v787 = vpop.permute.xlu0 %786
        %v788 = vsel %vm468, %v785, %v787
        %v789 = vsel %vm468, %v783, %v785
        %v790 = vsel %vm468, %v787, %v783
        %791 = vrot.lane.b32.xlu0 %v743, 111
        %v792 = vpop.permute.xlu0 %791
        %793 = vrot.lane.b32.xlu0 %v744, 111
        %v794 = vpop.permute.xlu0 %793
        %795 = vrot.lane.b32.xlu0 %v745, 111
        %v796 = vpop.permute.xlu0 %795
        %v797 = vsel %vm478, %v794, %v796
        %v798 = vsel %vm478, %v792, %v794
        %v799 = vsel %vm478, %v796, %v792
        %800 = vrot.lane.b32.xlu0 %v743, 110
        %v801 = vpop.permute.xlu0 %800
        %802 = vrot.lane.b32.xlu0 %v744, 110
        %v803 = vpop.permute.xlu0 %802
        %804 = vrot.lane.b32.xlu0 %v745, 110
        %v805 = vpop.permute.xlu0 %804
        %v806 = vsel %vm488, %v803, %v805
        %v807 = vsel %vm488, %v801, %v803
        %v808 = vsel %vm488, %v805, %v801
        %809 = vrot.lane.b32.xlu0 %v743, 109
        %v810 = vpop.permute.xlu0 %809
        %811 = vrot.lane.b32.xlu0 %v744, 109
        %v812 = vpop.permute.xlu0 %811
        %813 = vrot.lane.b32.xlu0 %v745, 109
        %v814 = vpop.permute.xlu0 %813
        %v815 = vsel %vm498, %v812, %v814
        %v816 = vsel %vm498, %v810, %v812
        %v817 = vsel %vm498, %v814, %v810
        %819 = vset.pattern.permute.xlu0 0
        %820 = vperm.xlu0 %819, %v300
        %v821 = vpop.permute.xlu0 %820
        %v824 = vsel %vm507, %v298, 0
        %826 = vmatprep.subr.mxu0 %v753
        %827 = vmatpush1.msra.mxu0 %v754
        %828 = vmatprep.subr.mxu0 %v762
        %829 = vmatpush1.msra.mxu0 %v763
        %830 = vmatprep.subr.mxu0 %v771
        %831 = vmatpush1.msra.mxu0 %v772
        %832 = vmatprep.subr.mxu0 %v780
        %833 = vmatpush1.msra.mxu0 %v781
        %834 = vmatprep.subr.mxu0 %v744
        %835 = vmatpush1.msra.mxu0 %v743
        %836 = vmatprep.subr.mxu0 %v788
        %837 = vmatpush1.msra.mxu0 %v789
        %838 = vmatprep.subr.mxu0 %v797
        %839 = vmatpush1.msra.mxu0 %v798
        %840 = vmatprep.subr.mxu0 %v806
        %841 = vmatpush1.msra.mxu0 %v807
        %842 = vmatprep.subr.mxu0 %v815
        %843 = vmatpush1.msra.mxu0 %v816
        %844 = vmatprep.subr.mxu0 0.0
        %845 = vmatpush1.msra.mxu0 0.0
        %846 = vmatprep.subr.mxu0 0.0
        %847 = vmatpush1.msra.mxu0 0.0
        %848 = vmatprep.subr.mxu0 0.0
        %849 = vmatpush1.msra.mxu0 0.0
        %850 = vmatprep.subr.mxu0 0.0
        %851 = vmatpush1.msra.mxu0 0.0
        %852 = vmatprep.subr.mxu0 0.0
        %853 = vmatpush1.msra.mxu0 0.0
        %854 = vmatprep.subr.mxu0 0.0
        %855 = vmatpush1.msra.mxu0 0.0
        %856 = vmatprep.subr.mxu0 0.0
        %857 = vmatpush1.msra.mxu0 0.0
        %858 = vmatprep.subr.mxu0 0.0
        %859 = vmatpush1.msra.mxu0 0.0
        %860 = vmatprep.subr.mxu0 0.0
        %861 = vmatpush1.msra.mxu0 0.0
        %862 = vmatprep.subr.mxu0 0.0
        %863 = vmatpush1.msra.mxu0 0.0
        %864 = vmatprep.subr.mxu0 0.0
        %865 = vmatpush1.msra.mxu0 0.0
        %866 = vmatprep.subr.mxu0 0.0
        %867 = vmatpush1.msra.mxu0 0.0
        %868 = vmatprep.subr.mxu0 0.0
        %869 = vmatpush1.msra.mxu0 0.0
        %870 = vmatprep.subr.mxu0 0.0
        %871 = vmatpush1.msra.mxu0 0.0
        %872 = vmatprep.subr.mxu0 0.0
        %873 = vmatpush1.msra.mxu0 0.0
        %874 = vmatprep.subr.mxu0 0.0
        %875 = vmatpush1.msra.mxu0 0.0
        %876 = vmatprep.subr.mxu0 0.0
        %877 = vmatpush1.msra.mxu0 0.0
        %878 = vmatprep.subr.mxu0 0.0
        %879 = vmatpush1.msra.mxu0 0.0
        %880 = vmatprep.subr.mxu0 0.0
        %881 = vmatpush1.msra.mxu0 0.0
        %882 = vmatprep.subr.mxu0 0.0
        %883 = vmatpush1.msra.mxu0 0.0
        %884 = vmatprep.subr.mxu0 0.0
        %885 = vmatpush1.msra.mxu0 0.0
        %886 = vmatprep.subr.mxu0 0.0
        %887 = vmatpush1.msra.mxu0 0.0
        %888 = vmatprep.subr.mxu0 0.0
        %889 = vmatpush1.msra.mxu0 0.0
        %890 = vmatprep.mubr.f32.mxu0 0.0
        %891 = vmatmul.mubr.f32.gmra.mrb[0].mxu0 %v824
        %v892 = vpop.f32.mrb[0].mxu0
        %v893 = vadd.f32 %v821, %v892
        %v894 = vpop.f32.mrb[0].mxu0
        %v895 = vadd.f32 %v821, %v894
        %896 = vdwg.mxu0
        %897 = vmatprep.subr.mxu0 0.0
        %898 = vmatpush1.msra.mxu0 %v752
        %899 = vmatprep.subr.mxu0 0.0
        %900 = vmatpush1.msra.mxu0 %v761
        %901 = vmatprep.subr.mxu0 0.0
        %902 = vmatpush1.msra.mxu0 %v770
        %903 = vmatprep.subr.mxu0 0.0
        %904 = vmatpush1.msra.mxu0 %v779
        %905 = vmatprep.subr.mxu0 0.0
        %906 = vmatpush1.msra.mxu0 %v745
        %907 = vmatprep.subr.mxu0 0.0
        %908 = vmatpush1.msra.mxu0 %v790
        %909 = vmatprep.subr.mxu0 0.0
        %910 = vmatpush1.msra.mxu0 %v799
        %911 = vmatprep.subr.mxu0 0.0
        %912 = vmatpush1.msra.mxu0 %v808
        %913 = vmatprep.subr.mxu0 0.0
        %914 = vmatpush1.msra.mxu0 %v817
        %915 = vmatprep.subr.mxu0 0.0
        %916 = vmatpush1.msra.mxu0 0.0
        %917 = vmatprep.subr.mxu0 0.0
        %918 = vmatpush1.msra.mxu0 0.0
        %919 = vmatprep.subr.mxu0 0.0
        %920 = vmatpush1.msra.mxu0 0.0
        %921 = vmatprep.subr.mxu0 0.0
        %922 = vmatpush1.msra.mxu0 0.0
        %923 = vmatprep.subr.mxu0 0.0
        %924 = vmatpush1.msra.mxu0 0.0
        %925 = vmatprep.subr.mxu0 0.0
        %926 = vmatpush1.msra.mxu0 0.0
        %927 = vmatprep.subr.mxu0 0.0
        %928 = vmatpush1.msra.mxu0 0.0
        %929 = vmatprep.subr.mxu0 0.0
        %930 = vmatpush1.msra.mxu0 0.0
        %931 = vmatprep.subr.mxu0 0.0
        %932 = vmatpush1.msra.mxu0 0.0
        %933 = vmatprep.subr.mxu0 0.0
        %934 = vmatpush1.msra.mxu0 0.0
        %935 = vmatprep.subr.mxu0 0.0
        %936 = vmatpush1.msra.mxu0 0.0
        %937 = vmatprep.subr.mxu0 0.0
        %938 = vmatpush1.msra.mxu0 0.0
        %939 = vmatprep.subr.mxu0 0.0
        %940 = vmatpush1.msra.mxu0 0.0
        %941 = vmatprep.subr.mxu0 0.0
        %942 = vmatpush1.msra.mxu0 0.0
        %943 = vmatprep.subr.mxu0 0.0
        %944 = vmatpush1.msra.mxu0 0.0
        %945 = vmatprep.subr.mxu0 0.0
        %946 = vmatpush1.msra.mxu0 0.0
        %947 = vmatprep.subr.mxu0 0.0
        %948 = vmatpush1.msra.mxu0 0.0
        %949 = vmatprep.subr.mxu0 0.0
        %950 = vmatpush1.msra.mxu0 0.0
        %951 = vmatprep.subr.mxu0 0.0
        %952 = vmatpush1.msra.mxu0 0.0
        %953 = vmatprep.subr.mxu0 0.0
        %954 = vmatpush1.msra.mxu0 0.0
        %955 = vmatprep.subr.mxu0 0.0
        %956 = vmatpush1.msra.mxu0 0.0
        %957 = vmatprep.subr.mxu0 0.0
        %958 = vmatpush1.msra.mxu0 0.0
        %959 = vmatprep.subr.mxu0 0.0
        %960 = vmatpush1.msra.mxu0 0.0
        %961 = vmatprep.mubr.f32.mxu0 0.0
        %962 = vmatmul.mubr.f32.gmra.mrb[0].mxu0 %v824
        %v963 = vpop.f32.mrb[0].mxu0
        %v964 = vadd.f32 %v821, %v963
        %v965 = vpop.f32.mrb[0].mxu0
        %966 = vdwg.mxu0
        %v967 = vmul.f32 %v893, %v656
        %v968 = vmul.f32 %v895, %v660
        %v969 = vmul.f32 %v964, %v664
        %v970 = vadd.f32 %v967, %v968
        %v971 = vadd.f32 %v970, %v969
        %972 = vadd.xlane.f32.xlu0 %v971
        %v973 = vpop.xlane.xlu0 %972
        %v974 = vmul.f32 %v973, 0.00390625
        %v975 = vsub.f32 %v893, %v974
        %v976 = vsub.f32 %v895, %v974
        %v977 = vsub.f32 %v964, %v974
        %v978 = vmul.f32 %v975, %v656
        %v979 = vmul.f32 %v976, %v660
        %v980 = vmul.f32 %v977, %v664
        %v981 = vmul.f32 %v978, %v978
        %v982 = vmul.f32 %v979, %v979
        %v983 = vmul.f32 %v980, %v980
        %v984 = vadd.f32 %v981, %v982
        %v985 = vadd.f32 %v984, %v983
        %986 = vadd.xlane.f32.xlu0 %v985
        %v987 = vpop.xlane.xlu0 %986
        %v988 = vmul.f32 %v987, 0.00390625
        %v989 = vadd.f32 %v988, 1e-05
        %v990 = vrsqrt.pop %v989
        %v991 = vmul.f32 %v975, %v990
        %v992 = vmul.f32 %v976, %v990
        %v993 = vmul.f32 %v977, %v990
        %v994 = vadd.f32 %v419, %v991
        %v995 = vadd.f32 %v420, %v992
        %v996 = vadd.f32 %v421, %v993
        %997 = vst [vmem:[%s280] sm:$0xff] %v994
        %998 = vst [vmem:[%s280 + $0x8] sm:$0xff] %v995
        %999 = vst [vmem:[%s280 + $0x10] sm:$0xff] %v996
        %s1000 = sand.u32 %s163, 1
        %s1001 = scalar_lea.sflag [#allocation4], %s1000
        %s1002 = sand.u32 %s163, 1
        %s1003 = smul.addr %s1002, 24
        %s1004 = scalar_lea.vmem [#allocation7], %s1003
        // Predicated region
        $region53: #{tpu_custom_call.1} parent=43 // pred_check
          %p1005 = pneg %p173
        $region54: #{tpu_custom_call.1} parent=43 // pred_check_branch
          %1007 = sbr.rel (%p1005) target = $region56
        $region55: #{tpu_custom_call.1} parent=43 // pred_region
          %s1009 = ssub.s32 384, 384
          %1010 = vsyncadd %s1001, %s1009
          %s1011 = smul.addr %s24, 3
          %s1012 = smul.addr %s1011, 128
          %s1013 = scalar_lea.hbm %s6, %s1012
          %s1015 = sshll.u32 %s1004, 4
          %s1016 = int_to_ptr.vmem [resolvable:$true] %s1015
          %1018 = dma.vmem_to_hbm [thread:$0]  %s1016, 384, %s1013, %s1001
        $region56: #{tpu_custom_call.1} parent=43 // pred_fallthru
          _
      $region44: #{tpu_custom_call.1} parent=5 // pred_fallthru
        _
      %p1019 = scmp.le.s32.totalorder 2, %s19
      // Predicated region
      $region57: #{tpu_custom_call.1} parent=5 // pred_check
        %p1020 = pneg %p1019
      $region58: #{tpu_custom_call.1} parent=5 // pred_check_branch
        %1022 = sbr.rel (%p1020) target = $region60
      $region59: #{tpu_custom_call.1} parent=5 // pred_region
        %s1023 = ssub.s32 %s19, 2
        // Predicated region
        $region61: #{tpu_custom_call.1} parent=59 // pred_check
          %p1024 = pneg %p179
        $region62: #{tpu_custom_call.1} parent=59 // pred_check_branch
          %1026 = sbr.rel (%p1024) target = $region64
        $region63: #{tpu_custom_call.1} parent=59 // pred_region
          %s1027 = sand.u32 %s164, 1
          %s1028 = scalar_lea.sflag [#allocation4], %s1027
          %s1029 = sand.u32 %s164, 1
          %s1030 = smul.addr %s1029, 24
          %s1031 = scalar_lea.vmem [#allocation7], %s1030
          %1032 = dma.done %s1028, 384
        $region64: #{tpu_custom_call.1} parent=59 // pred_fallthru
          _
      $region60: #{tpu_custom_call.1} parent=5 // pred_fallthru
        _
    $region6: #{tpu_custom_call.1} parent=1 // loop_footer
      %s23 = sadd.s32 1, %s19
    $region7: #{tpu_custom_call.1} parent=1 // loop_footer_branch
      %18 = sbr.rel target = $region3
    $region8: #{tpu_custom_call.1} parent=1 // loop_exit
      _
    %1033 = vsyncpa [#allocation3], 1
    %s1034 = scalar_lea.sflag [#allocation3], 1
    %1035 = vsyncpa %s1034, 1
    %1036 = vsyncpa [#allocation6], 1
    %1037 = vsyncpa [#allocation4], 1
    %s1038 = scalar_lea.sflag [#allocation4], 1
    %1039 = vsyncpa %s1038, 1

// kernel: tpu_custom_call.1
$region0: #{tpu_custom_call.1}
  #allocation0 [shape = 'u32[]', space=smem, size = 0x4, offset = 0x4, fixed_abs, tag = 'smem constant byte address 0x4 - core index']
  #allocation1 [shape = 'u32[144,128]{1,0:T(1,128)}', space=vmem, size = 0x12000, scoped, tag = 'internal scratch']
  %s0 = inlined_call_operand.hbm [shape: f32[2,8,384], index: 0, kind: input, shape index: {}]
  %s1 = inlined_call_operand.hbm [shape: s32[2,384], index: 1, kind: input, shape index: {}]
  %s2 = inlined_call_operand.vmem [shape: f32[8,72], index: 2, kind: input, shape index: {}]
  %s3 = inlined_call_operand.vmem [shape: f32[8,1], index: 3, kind: input, shape index: {}]
  %s4 = inlined_call_operand.vmem [shape: f32[8,72], index: 4, kind: input, shape index: {}]
  %s5 = inlined_call_operand.vmem [shape: f32[8,1], index: 5, kind: input, shape index: {}]
  %s6 = inlined_call_operand.hbm [shape: f32[2,8,384], index: 6, kind: output, shape index: {}]
  %s7 = sld [smem:[#allocation0]]
  $region65: #{tpu_custom_call.1} parent=0
    _
  %s9 = ssub.s32 1, %s7
  %s10 = scalar_select 0, %s9, %s7
  $region1: #{tpu_custom_call.1} parent=0
    #allocation2 [shape = 'u8[24576]{0}', space=vmem, size = 0x6000, scoped, tag = 'input window, operand 0']
    #allocation3 [shape = 's32[2]{0}', space=sflag, size = 0x8, scoped, tag = 'scoped memory for tpu_custom_call.1']
    #allocation4 [shape = 's32[2]{0}', space=sflag, size = 0x8, scoped, tag = 'scoped memory for tpu_custom_call.1']
    #allocation5 [shape = 'u8[3072]{0}', space=vmem, size = 0xc00, scoped, tag = 'input window, operand 1, single buffered']
    #allocation6 [shape = 's32[1]{0}', space=sflag, size = 0x4, scoped, tag = 'scoped memory for tpu_custom_call.1']
    #allocation7 [shape = 'u8[24576]{0}', space=vmem, size = 0x6000, scoped, tag = 'output window, operand 0']
    %11 = vsyncpa [#allocation3], 0
    %s12 = scalar_lea.sflag [#allocation3], 1
    %13 = vsyncpa %s12, 0
    %14 = vsyncpa [#allocation6], 0
    %15 = vsyncpa [#allocation4], 0
    %s16 = scalar_lea.sflag [#allocation4], 1
    %17 = vsyncpa %s16, 0
    loop: start=0, step=1, limit=4
    $region2: #{tpu_custom_call.1} parent=1 // loop_pre_header
      _
    $region3: #{tpu_custom_call.1} parent=1 // loop_header
      %s19 = sphi 0, %s23
      %p20 = scmp.ge.s32.totalorder %s19, 4
      %s29 = sphi 0, %s31
      %s32 = sphi 0, %s29
      %s33 = sphi 0, %s32
      %s49 = sphi 0, %s33
      %s53 = sphi 0, %s53
      %s55 = sphi 0, %s53
      %s56 = sphi 0, %s55
      %s70 = sphi 0, %s56
      %s74 = sphi 0, %s74
      %s76 = sphi 0, %s74
      %s77 = sphi 0, %s76
      %s91 = sphi 0, %s77
      %s95 = sphi 0, %s95
      %s97 = sphi 0, %s95
      %s98 = sphi 0, %s97
      %s112 = sphi 0, %s98
      %s116 = sphi 0, %s116
      %s118 = sphi 0, %s116
      %s119 = sphi 0, %s118
      %s133 = sphi 0, %s119
      %s137 = sphi 0, %s137
      %s139 = sphi 0, %s137
      %s140 = sphi 0, %s139
      %s154 = sphi 0, %s140
      %s160 = sphi 0, %s162
      %s163 = sphi 0, %s160
      %s164 = sphi 0, %s163
      %s180 = sphi 0, %s164
    $region4: #{tpu_custom_call.1} parent=1 // loop_header_branch
      %22 = sbr.rel (%p20) target = $region8
    $region5: #{tpu_custom_call.1} parent=1 // loop_body
      %s24 = ssub.s32 %s19, 1
      %s25 = ssub.s32 %s19, 2
      %s26 = sadd.s32 %s19, 1
      %s27 = ssub.s32 %s19, %s26
      %p28 = scmp.eq.s32.totalorder %s27, 0
      %s30 = sadd.s32 %s29, 1
      %s31 = scalar_select %p28, %s29, %s30
      %p34 = pneg %p28
      %p35 = scmp.eq.s32.totalorder %s19, 1
      %p36 = por %p34, %p35
      %p37 = scmp.ne.s32.totalorder %s29, %s32
      %p38 = scmp.eq.s32.totalorder %s19, 0
      %p39 = por %p37, %p38
      %p40 = scmp.ne.s32.totalorder %s29, %s32
      %p41 = scmp.eq.s32.totalorder %s24, 1
      %p42 = por %p40, %p41
      %p43 = scmp.ne.s32.totalorder %s32, %s33
      %p44 = scmp.eq.s32.totalorder %s24, 0
      %p45 = por %p43, %p44
      %p46 = scmp.ne.s32.totalorder %s32, %s33
      %p47 = scmp.eq.s32.totalorder %s25, 1
      %p48 = por %p46, %p47
      %p50 = scmp.ne.s32.totalorder %s33, %s49
      %p51 = scmp.eq.s32.totalorder %s25, 0
      %p52 = por %p50, %p51
      %s54 = sadd.s32 %s53, 1
      %p57 = scmp.eq.s32.totalorder %s19, 1
      %p58 = scmp.ne.s32.totalorder %s53, %s55
      %p59 = scmp.eq.s32.totalorder %s19, 0
      %p60 = por %p58, %p59
      %p61 = scmp.ne.s32.totalorder %s53, %s55
      %p62 = scmp.eq.s32.totalorder %s24, 1
      %p63 = por %p61, %p62
      %p64 = scmp.ne.s32.totalorder %s55, %s56
      %p65 = scmp.eq.s32.totalorder %s24, 0
      %p66 = por %p64, %p65
      %p67 = scmp.ne.s32.totalorder %s55, %s56
      %p68 = scmp.eq.s32.totalorder %s25, 1
      %p69 = por %p67, %p68
      %p71 = scmp.ne.s32.totalorder %s56, %s70
      %p72 = scmp.eq.s32.totalorder %s25, 0
      %p73 = por %p71, %p72
      %s75 = sadd.s32 %s74, 1
      %p78 = scmp.eq.s32.totalorder %s19, 1
      %p79 = scmp.ne.s32.totalorder %s74, %s76
      %p80 = scmp.eq.s32.totalorder %s19, 0
      %p81 = por %p79, %p80
      %p82 = scmp.ne.s32.totalorder %s74, %s76
      %p83 = scmp.eq.s32.totalorder %s24, 1
      %p84 = por %p82, %p83
      %p85 = scmp.ne.s32.totalorder %s76, %s77
      %p86 = scmp.eq.s32.totalorder %s24, 0
      %p87 = por %p85, %p86
      %p88 = scmp.ne.s32.totalorder %s76, %s77
      %p89 = scmp.eq.s32.totalorder %s25, 1
      %p90 = por %p88, %p89
      %p92 = scmp.ne.s32.totalorder %s77, %s91
      %p93 = scmp.eq.s32.totalorder %s25, 0
      %p94 = por %p92, %p93
      %s96 = sadd.s32 %s95, 1
      %p99 = scmp.eq.s32.totalorder %s19, 1
      %p100 = scmp.ne.s32.totalorder %s95, %s97
      %p101 = scmp.eq.s32.totalorder %s19, 0
      %p102 = por %p100, %p101
      %p103 = scmp.ne.s32.totalorder %s95, %s97
      %p104 = scmp.eq.s32.totalorder %s24, 1
      %p105 = por %p103, %p104
      %p106 = scmp.ne.s32.totalorder %s97, %s98
      %p107 = scmp.eq.s32.totalorder %s24, 0
      %p108 = por %p106, %p107
      %p109 = scmp.ne.s32.totalorder %s97, %s98
      %p110 = scmp.eq.s32.totalorder %s25, 1
      %p111 = por %p109, %p110
      %p113 = scmp.ne.s32.totalorder %s98, %s112
      %p114 = scmp.eq.s32.totalorder %s25, 0
      %p115 = por %p113, %p114
      %s117 = sadd.s32 %s116, 1
      %p120 = scmp.eq.s32.totalorder %s19, 1
      %p121 = scmp.ne.s32.totalorder %s116, %s118
      %p122 = scmp.eq.s32.totalorder %s19, 0
      %p123 = por %p121, %p122
      %p124 = scmp.ne.s32.totalorder %s116, %s118
      %p125 = scmp.eq.s32.totalorder %s24, 1
      %p126 = por %p124, %p125
      %p127 = scmp.ne.s32.totalorder %s118, %s119
      %p128 = scmp.eq.s32.totalorder %s24, 0
      %p129 = por %p127, %p128
      %p130 = scmp.ne.s32.totalorder %s118, %s119
      %p131 = scmp.eq.s32.totalorder %s25, 1
      %p132 = por %p130, %p131
      %p134 = scmp.ne.s32.totalorder %s119, %s133
      %p135 = scmp.eq.s32.totalorder %s25, 0
      %p136 = por %p134, %p135
      %s138 = sadd.s32 %s137, 1
      %p141 = scmp.eq.s32.totalorder %s19, 1
      %p142 = scmp.ne.s32.totalorder %s137, %s139
      %p143 = scmp.eq.s32.totalorder %s19, 0
      %p144 = por %p142, %p143
      %p145 = scmp.ne.s32.totalorder %s137, %s139
      %p146 = scmp.eq.s32.totalorder %s24, 1
      %p147 = por %p145, %p146
      %p148 = scmp.ne.s32.totalorder %s139, %s140
      %p149 = scmp.eq.s32.totalorder %s24, 0
      %p150 = por %p148, %p149
      %p151 = scmp.ne.s32.totalorder %s139, %s140
      %p152 = scmp.eq.s32.totalorder %s25, 1
      %p153 = por %p151, %p152
      %p155 = scmp.ne.s32.totalorder %s140, %s154
      %p156 = scmp.eq.s32.totalorder %s25, 0
      %p157 = por %p155, %p156
      %s158 = ssub.s32 %s19, %s26
      %p159 = scmp.eq.s32.totalorder %s158, 0
      %s161 = sadd.s32 %s160, 1
      %s162 = scalar_select %p159, %s160, %s161
      %p165 = pneg %p159
      %p166 = scmp.eq.s32.totalorder %s19, 1
      %p167 = por %p165, %p166
      %p168 = scmp.ne.s32.totalorder %s160, %s163
      %p169 = scmp.eq.s32.totalorder %s19, 0
      %p170 = por %p168, %p169
      %p171 = scmp.ne.s32.totalorder %s160, %s163
      %p172 = scmp.eq.s32.totalorder %s24, 1
      %p173 = por %p171, %p172
      %p174 = scmp.ne.s32.totalorder %s163, %s164
      %p175 = scmp.eq.s32.totalorder %s24, 0
      %p176 = por %p174, %p175
      %p177 = scmp.ne.s32.totalorder %s163, %s164
      %p178 = scmp.eq.s32.totalorder %s25, 1
      %p179 = por %p177, %p178
      %p181 = scmp.ne.s32.totalorder %s164, %s180
      %p182 = scmp.eq.s32.totalorder %s25, 0
      %p183 = por %p181, %p182
      %p184 = scmp.le.s32.totalorder 1, %s19
      %p185 = scmp.lt.s32.totalorder %s19, 3
      %p186 = pnand %p184, %p185
      %p187 = pneg %p186
      // Predicated region
      $region9: #{tpu_custom_call.1} parent=5 // pred_check
        _
      $region10: #{tpu_custom_call.1} parent=5 // pred_check_branch
        %189 = sbr.rel (%p186) target = $region12
      $region11: #{tpu_custom_call.1} parent=5 // pred_region
        %s190 = ssub.s32 %s19, 1
        // Predicated region
        $region13: #{tpu_custom_call.1} parent=11 // pred_check
          %p191 = pneg %p66
        $region14: #{tpu_custom_call.1} parent=11 // pred_check_branch
          %193 = sbr.rel (%p191) target = $region16
        $region15: #{tpu_custom_call.1} parent=11 // pred_region
          %s195 = ssub.s32 96, 96
          %196 = vsyncadd [#allocation6], %s195
          %s198 = sshll.u32 [#allocation5], 4
          %s199 = int_to_ptr.vmem [resolvable:$true] %s198
          %201 = dma.hbm_to_vmem [thread:$0]  %s1, 96, %s199, [#allocation6]
        $region16: #{tpu_custom_call.1} parent=11 // pred_fallthru
          _
        // Predicated region
        $region17: #{tpu_custom_call.1} parent=11 // pred_check
          %p202 = pneg %p87
        $region18: #{tpu_custom_call.1} parent=11 // pred_check_branch
          %204 = sbr.rel (%p202) target = $region20
        $region19: #{tpu_custom_call.1} parent=11 // pred_region
          _
        $region20: #{tpu_custom_call.1} parent=11 // pred_fallthru
          _
        // Predicated region
        $region21: #{tpu_custom_call.1} parent=11 // pred_check
          %p205 = pneg %p108
        $region22: #{tpu_custom_call.1} parent=11 // pred_check_branch
          %207 = sbr.rel (%p205) target = $region24
        $region23: #{tpu_custom_call.1} parent=11 // pred_region
          _
        $region24: #{tpu_custom_call.1} parent=11 // pred_fallthru
          _
        // Predicated region
        $region25: #{tpu_custom_call.1} parent=11 // pred_check
          %p208 = pneg %p129
        $region26: #{tpu_custom_call.1} parent=11 // pred_check_branch
          %210 = sbr.rel (%p208) target = $region28
        $region27: #{tpu_custom_call.1} parent=11 // pred_region
          _
        $region28: #{tpu_custom_call.1} parent=11 // pred_fallthru
          _
        // Predicated region
        $region29: #{tpu_custom_call.1} parent=11 // pred_check
          %p211 = pneg %p150
        $region30: #{tpu_custom_call.1} parent=11 // pred_check_branch
          %213 = sbr.rel (%p211) target = $region32
        $region31: #{tpu_custom_call.1} parent=11 // pred_region
          _
        $region32: #{tpu_custom_call.1} parent=11 // pred_fallthru
          _
      $region12: #{tpu_custom_call.1} parent=5 // pred_fallthru
        _
      %p214 = scmp.lt.s32.totalorder %s19, 2
      // Predicated region
      $region33: #{tpu_custom_call.1} parent=5 // pred_check
        %p215 = pneg %p214
      $region34: #{tpu_custom_call.1} parent=5 // pred_check_branch
        %217 = sbr.rel (%p215) target = $region36
      $region35: #{tpu_custom_call.1} parent=5 // pred_region
        // Predicated region
        $region37: #{tpu_custom_call.1} parent=35 // pred_check
          %p218 = pneg %p39
        $region38: #{tpu_custom_call.1} parent=35 // pred_check_branch
          %220 = sbr.rel (%p218) target = $region40
        $region39: #{tpu_custom_call.1} parent=35 // pred_region
          %s221 = sand.u32 %s29, 1
          %s222 = scalar_lea.sflag [#allocation3], %s221
          %s223 = sand.u32 %s29, 1
          %s224 = smul.addr %s223, 24
          %s225 = scalar_lea.vmem [#allocation2], %s224
          %s227 = ssub.s32 384, 384
          %228 = vsyncadd %s222, %s227
          %s229 = smul.addr %s19, 3
          %s230 = smul.addr %s229, 128
          %s231 = scalar_lea.hbm %s0, %s230
          %s233 = sshll.u32 %s225, 4
          %s234 = int_to_ptr.vmem [resolvable:$true] %s233
          %236 = dma.hbm_to_vmem [thread:$0]  %s231, 384, %s234, %s222
        $region40: #{tpu_custom_call.1} parent=35 // pred_fallthru
          _
      $region36: #{tpu_custom_call.1} parent=5 // pred_fallthru
        _
      %p237 = scmp.le.s32.totalorder 1, %s19
      %p238 = scmp.lt.s32.totalorder %s19, 3
      %p239 = pnand %p237, %p238
      %p240 = pneg %p239
      // Predicated region
      $region41: #{tpu_custom_call.1} parent=5 // pred_check
        _
      $region42: #{tpu_custom_call.1} parent=5 // pred_check_branch
        %242 = sbr.rel (%p239) target = $region44
      $region43: #{tpu_custom_call.1} parent=5 // pred_region
        %s243 = ssub.s32 %s19, 1
        %s244 = sand.u32 %s32, 1
        %s245 = scalar_lea.sflag [#allocation3], %s244
        %s246 = sand.u32 %s32, 1
        %s247 = smul.addr %s246, 24
        %s248 = scalar_lea.vmem [#allocation2], %s247
        // Predicated region
        $region45: #{tpu_custom_call.1} parent=43 // pred_check
          %p249 = pneg %p45
        $region46: #{tpu_custom_call.1} parent=43 // pred_check_branch
          %251 = sbr.rel (%p249) target = $region48
        $region47: #{tpu_custom_call.1} parent=43 // pred_region
          %252 = dma.done %s245, 384
        $region48: #{tpu_custom_call.1} parent=43 // pred_fallthru
          _
        // Predicated region
        $region49: #{tpu_custom_call.1} parent=43 // pred_check
          %p253 = pneg %p66
        $region50: #{tpu_custom_call.1} parent=43 // pred_check_branch
          %255 = sbr.rel (%p253) target = $region52
        $region51: #{tpu_custom_call.1} parent=43 // pred_region
          %256 = dma.done [#allocation6], 96
        $region52: #{tpu_custom_call.1} parent=43 // pred_fallthru
          _
        %s257 = sand.u32 %s32, 1
        %s258 = scalar_lea.sflag [#allocation3], %s257
        %s259 = sand.u32 %s32, 1
        %s260 = smul.addr %s259, 24
        %s261 = scalar_lea.vmem [#allocation2], %s260
        %p262 = pneg %p45
        %p263 = pneg %p42
        %p264 = pneg %p66
        %p265 = pneg %p63
        %p266 = pneg %p87
        %p267 = pneg %p84
        %p268 = pneg %p108
        %p269 = pneg %p105
        %p270 = pneg %p129
        %p271 = pneg %p126
        %p272 = pneg %p150
        %p273 = pneg %p147
        %p274 = pneg %p176
        %p275 = pneg %p173
        %s276 = sand.u32 %s163, 1
        %s277 = scalar_lea.sflag [#allocation4], %s276
        %s278 = sand.u32 %s163, 1
        %s279 = smul.addr %s278, 24
        %s280 = scalar_lea.vmem [#allocation7], %s279
        %v281 = vld [vmem:[#allocation5] ss:$2 sm:$0x7]
        %s282 = scalar_lea.vmem [#allocation5], 1
        %v283 = vld [vmem:[%s282] ss:$2 sm:$0x7]
        %vm284 = vcmp.eq.s32.totalorder %v281, 0
        %vm285 = vcmp.eq.s32.totalorder %v281, 17
        %vm286 = vcmp.eq.s32.totalorder %v283, 0
        %vm287 = vcmp.eq.s32.totalorder %v283, 17
        %vm288 = vcmp.ge.s32.totalorder %v281, 1
        %vm289 = vcmp.le.s32.totalorder %v281, 16
        %vm290 = vmand %vm288, %vm289
        %vm291 = vcmp.ge.s32.totalorder %v283, 1
        %vm292 = vmand %vm290, %vm291
        %vm293 = vcmp.le.s32.totalorder %v283, 16
        %vm294 = vmand %vm292, %vm293
        %v295 = vsel %vm294, 1, 0
        %v296 = vcvt.s32.f32 %v295
        %v297 = vld [vmem:[%s2] sm:$0xff]
        %v298 = vld [vmem:[%s4] sm:$0xff]
        %v299 = vld [vmem:[%s3] sm:$0xff]
        %v300 = vld [vmem:[%s5] sm:$0xff]
        %v301 = vld [vmem:[%s248] sm:$0xff]
        %v302 = vld [vmem:[%s248 + $0x8] sm:$0xff]
        %v303 = vld [vmem:[%s248 + $0x10] sm:$0xff]
        %304 = vrot.lane.b32.xlu0 %v301, 92
        %v305 = vpop.permute.xlu0 %304
        %306 = vrot.lane.b32.xlu0 %v302, 92
        %v307 = vpop.permute.xlu0 %306
        %308 = vrot.lane.b32.xlu0 %v303, 92
        %v309 = vpop.permute.xlu0 %308
        %v310 = vlaneseq
        %v311 = vand.u32 %v310, 127
        %vm312 = vcmp.lt.s32.totalorder %v311, 92
        %v313 = vsel %vm312, %v307, %v309
        %v314 = vsel %vm312, %v305, %v307
        %v315 = vsel %vm312, %v309, %v305
        %v316 = vsel %vm284, 1, 0
        %v317 = vlaneseq
        %v318 = vshrl.u32 %v317, 7
        %v319 = vsub.s32 0, %v318
        %v320 = vrot.slane %v316, %v319
        %v321 = vlaneseq
        %v322 = vshrl.u32 %v321, 7
        %v323 = vsub.s32 1, %v322
        %v324 = vrot.slane %v316, %v323
        %v325 = vlaneseq
        %v326 = vshrl.u32 %v325, 7
        %v327 = vsub.s32 2, %v326
        %v328 = vrot.slane %v316, %v327
        %vm329 = vcmp.eq.s32.totalorder %v320, 1
        %vm330 = vcmp.eq.s32.totalorder %v324, 1
        %vm331 = vcmp.eq.s32.totalorder %v328, 1
        %v332 = vsel %vm329, %v314, %v301
        %v333 = vsel %vm330, %v313, %v302
        %v334 = vsel %vm331, %v315, %v303
        %335 = vrot.lane.b32.xlu0 %v332, 36
        %v336 = vpop.permute.xlu0 %335
        %337 = vrot.lane.b32.xlu0 %v333, 36
        %v338 = vpop.permute.xlu0 %337
        %339 = vrot.lane.b32.xlu0 %v334, 36
        %v340 = vpop.permute.xlu0 %339
        %vm341 = vcmp.lt.s32.totalorder %v311, 36
        %v342 = vsel %vm341, %v338, %v340
        %v343 = vsel %vm341, %v336, %v338
        %v344 = vsel %vm341, %v340, %v336
        %v345 = vsel %vm285, 1, 0
        %v346 = vlaneseq
        %v347 = vshrl.u32 %v346, 7
        %v348 = vsub.s32 0, %v347
        %v349 = vrot.slane %v345, %v348
        %v350 = vlaneseq
        %v351 = vshrl.u32 %v350, 7
        %v352 = vsub.s32 1, %v351
        %v353 = vrot.slane %v345, %v352
        %v354 = vlaneseq
        %v355 = vshrl.u32 %v354, 7
        %v356 = vsub.s32 2, %v355
        %v357 = vrot.slane %v345, %v356
        %vm358 = vcmp.eq.s32.totalorder %v349, 1
        %vm359 = vcmp.eq.s32.totalorder %v353, 1
        %vm360 = vcmp.eq.s32.totalorder %v357, 1
        %v361 = vsel %vm358, %v344, %v332
        %v362 = vsel %vm359, %v343, %v333
        %v363 = vsel %vm360, %v342, %v334
        %364 = vrot.lane.b32.xlu0 %v361, 126
        %v365 = vpop.permute.xlu0 %364
        %366 = vrot.lane.b32.xlu0 %v362, 126
        %v367 = vpop.permute.xlu0 %366
        %368 = vrot.lane.b32.xlu0 %v363, 126
        %v369 = vpop.permute.xlu0 %368
        %vm370 = vcmp.lt.s32.totalorder %v311, 126
        %v371 = vsel %vm370, %v367, %v369
        %v372 = vsel %vm370, %v365, %v367
        %v373 = vsel %vm370, %v369, %v365
        %v374 = vsel %vm286, 1, 0
        %v375 = vlaneseq
        %v376 = vshrl.u32 %v375, 7
        %v377 = vsub.s32 0, %v376
        %v378 = vrot.slane %v374, %v377
        %v379 = vlaneseq
        %v380 = vshrl.u32 %v379, 7
        %v381 = vsub.s32 1, %v380
        %v382 = vrot.slane %v374, %v381
        %v383 = vlaneseq
        %v384 = vshrl.u32 %v383, 7
        %v385 = vsub.s32 2, %v384
        %v386 = vrot.slane %v374, %v385
        %vm387 = vcmp.eq.s32.totalorder %v378, 1
        %vm388 = vcmp.eq.s32.totalorder %v382, 1
        %vm389 = vcmp.eq.s32.totalorder %v386, 1
        %v390 = vsel %vm387, %v372, %v361
        %v391 = vsel %vm388, %v371, %v362
        %v392 = vsel %vm389, %v373, %v363
        %393 = vrot.lane.b32.xlu0 %v390, 2
        %v394 = vpop.permute.xlu0 %393
        %395 = vrot.lane.b32.xlu0 %v391, 2
        %v396 = vpop.permute.xlu0 %395
        %397 = vrot.lane.b32.xlu0 %v392, 2
        %v398 = vpop.permute.xlu0 %397
        %vm399 = vcmp.lt.s32.totalorder %v311, 2
        %v400 = vsel %vm399, %v396, %v398
        %v401 = vsel %vm399, %v394, %v396
        %v402 = vsel %vm399, %v398, %v394
        %v403 = vsel %vm287, 1, 0
        %v404 = vlaneseq
        %v405 = vshrl.u32 %v404, 7
        %v406 = vsub.s32 0, %v405
        %v407 = vrot.slane %v403, %v406
        %v408 = vlaneseq
        %v409 = vshrl.u32 %v408, 7
        %v410 = vsub.s32 1, %v409
        %v411 = vrot.slane %v403, %v410
        %v412 = vlaneseq
        %v413 = vshrl.u32 %v412, 7
        %v414 = vsub.s32 2, %v413
        %v415 = vrot.slane %v403, %v414
        %vm416 = vcmp.eq.s32.totalorder %v407, 1
        %vm417 = vcmp.eq.s32.totalorder %v411, 1
        %vm418 = vcmp.eq.s32.totalorder %v415, 1
        %v419 = vsel %vm416, %v402, %v390
        %v420 = vsel %vm417, %v401, %v391
        %v421 = vsel %vm418, %v400, %v392
        %422 = vrot.lane.b32.xlu0 %v419, 19
        %v423 = vpop.permute.xlu0 %422
        %424 = vrot.lane.b32.xlu0 %v420, 19
        %v425 = vpop.permute.xlu0 %424
        %426 = vrot.lane.b32.xlu0 %v421, 19
        %v427 = vpop.permute.xlu0 %426
        %vm428 = vcmp.lt.s32.totalorder %v311, 19
        %v429 = vsel %vm428, %v425, %v427
        %v430 = vsel %vm428, %v423, %v425
        %v431 = vsel %vm428, %v427, %v423
        %432 = vrot.lane.b32.xlu0 %v419, 18
        %v433 = vpop.permute.xlu0 %432
        %434 = vrot.lane.b32.xlu0 %v420, 18
        %v435 = vpop.permute.xlu0 %434
        %436 = vrot.lane.b32.xlu0 %v421, 18
        %v437 = vpop.permute.xlu0 %436
        %vm438 = vcmp.lt.s32.totalorder %v311, 18
        %v439 = vsel %vm438, %v435, %v437
        %v440 = vsel %vm438, %v433, %v435
        %v441 = vsel %vm438, %v437, %v433
        %442 = vrot.lane.b32.xlu0 %v419, 17
        %v443 = vpop.permute.xlu0 %442
        %444 = vrot.lane.b32.xlu0 %v420, 17
        %v445 = vpop.permute.xlu0 %444
        %446 = vrot.lane.b32.xlu0 %v421, 17
        %v447 = vpop.permute.xlu0 %446
        %vm448 = vcmp.lt.s32.totalorder %v311, 17
        %v449 = vsel %vm448, %v445, %v447
        %v450 = vsel %vm448, %v443, %v445
        %v451 = vsel %vm448, %v447, %v443
        %452 = vrot.lane.b32.xlu0 %v419, 1
        %v453 = vpop.permute.xlu0 %452
        %454 = vrot.lane.b32.xlu0 %v420, 1
        %v455 = vpop.permute.xlu0 %454
        %456 = vrot.lane.b32.xlu0 %v421, 1
        %v457 = vpop.permute.xlu0 %456
        %vm458 = vcmp.lt.s32.totalorder %v311, 1
        %v459 = vsel %vm458, %v455, %v457
        %v460 = vsel %vm458, %v453, %v455
        %v461 = vsel %vm458, %v457, %v453
        %462 = vrot.lane.b32.xlu0 %v419, 127
        %v463 = vpop.permute.xlu0 %462
        %464 = vrot.lane.b32.xlu0 %v420, 127
        %v465 = vpop.permute.xlu0 %464
        %466 = vrot.lane.b32.xlu0 %v421, 127
        %v467 = vpop.permute.xlu0 %466
        %vm468 = vcmp.lt.s32.totalorder %v311, 127
        %v469 = vsel %vm468, %v465, %v467
        %v470 = vsel %vm468, %v463, %v465
        %v471 = vsel %vm468, %v467, %v463
        %472 = vrot.lane.b32.xlu0 %v419, 111
        %v473 = vpop.permute.xlu0 %472
        %474 = vrot.lane.b32.xlu0 %v420, 111
        %v475 = vpop.permute.xlu0 %474
        %476 = vrot.lane.b32.xlu0 %v421, 111
        %v477 = vpop.permute.xlu0 %476
        %vm478 = vcmp.lt.s32.totalorder %v311, 111
        %v479 = vsel %vm478, %v475, %v477
        %v480 = vsel %vm478, %v473, %v475
        %v481 = vsel %vm478, %v477, %v473
        %482 = vrot.lane.b32.xlu0 %v419, 110
        %v483 = vpop.permute.xlu0 %482
        %484 = vrot.lane.b32.xlu0 %v420, 110
        %v485 = vpop.permute.xlu0 %484
        %486 = vrot.lane.b32.xlu0 %v421, 110
        %v487 = vpop.permute.xlu0 %486
        %vm488 = vcmp.lt.s32.totalorder %v311, 110
        %v489 = vsel %vm488, %v485, %v487
        %v490 = vsel %vm488, %v483, %v485
        %v491 = vsel %vm488, %v487, %v483
        %492 = vrot.lane.b32.xlu0 %v419, 109
        %v493 = vpop.permute.xlu0 %492
        %494 = vrot.lane.b32.xlu0 %v420, 109
        %v495 = vpop.permute.xlu0 %494
        %496 = vrot.lane.b32.xlu0 %v421, 109
        %v497 = vpop.permute.xlu0 %496
        %vm498 = vcmp.lt.s32.totalorder %v311, 109
        %v499 = vsel %vm498, %v495, %v497
        %v500 = vsel %vm498, %v493, %v495
        %v501 = vsel %vm498, %v497, %v493
        %503 = vset.pattern.permute.xlu0 0
        %504 = vperm.xlu0 %503, %v299
        %v505 = vpop.permute.xlu0 %504
        %vm507 = vcmask 588800
        %v509 = vsel %vm507, %v297, 0
        %511 = vmatprep.subr.mxu0 %v430
        %512 = vmatpush1.msra.mxu0 %v431
        %513 = vmatprep.subr.mxu0 %v440
        %514 = vmatpush1.msra.mxu0 %v441
        %515 = vmatprep.subr.mxu0 %v450
        %516 = vmatpush1.msra.mxu0 %v451
        %517 = vmatprep.subr.mxu0 %v460
        %518 = vmatpush1.msra.mxu0 %v461
        %519 = vmatprep.subr.mxu0 %v420
        %520 = vmatpush1.msra.mxu0 %v419
        %521 = vmatprep.subr.mxu0 %v469
        %522 = vmatpush1.msra.mxu0 %v470
        %523 = vmatprep.subr.mxu0 %v479
        %524 = vmatpush1.msra.mxu0 %v480
        %525 = vmatprep.subr.mxu0 %v489
        %526 = vmatpush1.msra.mxu0 %v490
        %527 = vmatprep.subr.mxu0 %v499
        %528 = vmatpush1.msra.mxu0 %v500
        %529 = vmatprep.subr.mxu0 0.0
        %530 = vmatpush1.msra.mxu0 0.0
        %531 = vmatprep.subr.mxu0 0.0
        %532 = vmatpush1.msra.mxu0 0.0
        %533 = vmatprep.subr.mxu0 0.0
        %534 = vmatpush1.msra.mxu0 0.0
        %535 = vmatprep.subr.mxu0 0.0
        %536 = vmatpush1.msra.mxu0 0.0
        %537 = vmatprep.subr.mxu0 0.0
        %538 = vmatpush1.msra.mxu0 0.0
        %539 = vmatprep.subr.mxu0 0.0
        %540 = vmatpush1.msra.mxu0 0.0
        %541 = vmatprep.subr.mxu0 0.0
        %542 = vmatpush1.msra.mxu0 0.0
        %543 = vmatprep.subr.mxu0 0.0
        %544 = vmatpush1.msra.mxu0 0.0
        %545 = vmatprep.subr.mxu0 0.0
        %546 = vmatpush1.msra.mxu0 0.0
        %547 = vmatprep.subr.mxu0 0.0
        %548 = vmatpush1.msra.mxu0 0.0
        %549 = vmatprep.subr.mxu0 0.0
        %550 = vmatpush1.msra.mxu0 0.0
        %551 = vmatprep.subr.mxu0 0.0
        %552 = vmatpush1.msra.mxu0 0.0
        %553 = vmatprep.subr.mxu0 0.0
        %554 = vmatpush1.msra.mxu0 0.0
        %555 = vmatprep.subr.mxu0 0.0
        %556 = vmatpush1.msra.mxu0 0.0
        %557 = vmatprep.subr.mxu0 0.0
        %558 = vmatpush1.msra.mxu0 0.0
        %559 = vmatprep.subr.mxu0 0.0
        %560 = vmatpush1.msra.mxu0 0.0
        %561 = vmatprep.subr.mxu0 0.0
        %562 = vmatpush1.msra.mxu0 0.0
        %563 = vmatprep.subr.mxu0 0.0
        %564 = vmatpush1.msra.mxu0 0.0
        %565 = vmatprep.subr.mxu0 0.0
        %566 = vmatpush1.msra.mxu0 0.0
        %567 = vmatprep.subr.mxu0 0.0
        %568 = vmatpush1.msra.mxu0 0.0
        %569 = vmatprep.subr.mxu0 0.0
        %570 = vmatpush1.msra.mxu0 0.0
        %571 = vmatprep.subr.mxu0 0.0
        %572 = vmatpush1.msra.mxu0 0.0
        %573 = vmatprep.subr.mxu0 0.0
        %574 = vmatpush1.msra.mxu0 0.0
        %575 = vmatprep.mubr.f32.mxu0 0.0
        %576 = vmatmul.mubr.f32.gmra.mrb[0].mxu0 %v509
        %v577 = vpop.f32.mrb[0].mxu0
        %v578 = vadd.f32 %v505, %v577
        %v579 = vpop.f32.mrb[0].mxu0
        %v580 = vadd.f32 %v505, %v579
        %581 = vdwg.mxu0
        %582 = vmatprep.subr.mxu0 0.0
        %583 = vmatpush1.msra.mxu0 %v429
        %584 = vmatprep.subr.mxu0 0.0
        %585 = vmatpush1.msra.mxu0 %v439
        %586 = vmatprep.subr.mxu0 0.0
        %587 = vmatpush1.msra.mxu0 %v449
        %588 = vmatprep.subr.mxu0 0.0
        %589 = vmatpush1.msra.mxu0 %v459
        %590 = vmatprep.subr.mxu0 0.0
        %591 = vmatpush1.msra.mxu0 %v421
        %592 = vmatprep.subr.mxu0 0.0
        %593 = vmatpush1.msra.mxu0 %v471
        %594 = vmatprep.subr.mxu0 0.0
        %595 = vmatpush1.msra.mxu0 %v481
        %596 = vmatprep.subr.mxu0 0.0
        %597 = vmatpush1.msra.mxu0 %v491
        %598 = vmatprep.subr.mxu0 0.0
        %599 = vmatpush1.msra.mxu0 %v501
        %600 = vmatprep.subr.mxu0 0.0
        %601 = vmatpush1.msra.mxu0 0.0
        %602 = vmatprep.subr.mxu0 0.0
        %603 = vmatpush1.msra.mxu0 0.0
        %604 = vmatprep.subr.mxu0 0.0
        %605 = vmatpush1.msra.mxu0 0.0
        %606 = vmatprep.subr.mxu0 0.0
        %607 = vmatpush1.msra.mxu0 0.0
        %608 = vmatprep.subr.mxu0 0.0
        %609 = vmatpush1.msra.mxu0 0.0
        %610 = vmatprep.subr.mxu0 0.0
        %611 = vmatpush1.msra.mxu0 0.0
        %612 = vmatprep.subr.mxu0 0.0
        %613 = vmatpush1.msra.mxu0 0.0
        %614 = vmatprep.subr.mxu0 0.0
        %615 = vmatpush1.msra.mxu0 0.0
        %616 = vmatprep.subr.mxu0 0.0
        %617 = vmatpush1.msra.mxu0 0.0
        %618 = vmatprep.subr.mxu0 0.0
        %619 = vmatpush1.msra.mxu0 0.0
        %620 = vmatprep.subr.mxu0 0.0
        %621 = vmatpush1.msra.mxu0 0.0
        %622 = vmatprep.subr.mxu0 0.0
        %623 = vmatpush1.msra.mxu0 0.0
        %624 = vmatprep.subr.mxu0 0.0
        %625 = vmatpush1.msra.mxu0 0.0
        %626 = vmatprep.subr.mxu0 0.0
        %627 = vmatpush1.msra.mxu0 0.0
        %628 = vmatprep.subr.mxu0 0.0
        %629 = vmatpush1.msra.mxu0 0.0
        %630 = vmatprep.subr.mxu0 0.0
        %631 = vmatpush1.msra.mxu0 0.0
        %632 = vmatprep.subr.mxu0 0.0
        %633 = vmatpush1.msra.mxu0 0.0
        %634 = vmatprep.subr.mxu0 0.0
        %635 = vmatpush1.msra.mxu0 0.0
        %636 = vmatprep.subr.mxu0 0.0
        %637 = vmatpush1.msra.mxu0 0.0
        %638 = vmatprep.subr.mxu0 0.0
        %639 = vmatpush1.msra.mxu0 0.0
        %640 = vmatprep.subr.mxu0 0.0
        %641 = vmatpush1.msra.mxu0 0.0
        %642 = vmatprep.subr.mxu0 0.0
        %643 = vmatpush1.msra.mxu0 0.0
        %644 = vmatprep.subr.mxu0 0.0
        %645 = vmatpush1.msra.mxu0 0.0
        %646 = vmatprep.mubr.f32.mxu0 0.0
        %647 = vmatmul.mubr.f32.gmra.mrb[0].mxu0 %v509
        %v648 = vpop.f32.mrb[0].mxu0
        %v649 = vadd.f32 %v505, %v648
        %v650 = vpop.f32.mrb[0].mxu0
        %651 = vdwg.mxu0
        %v653 = vlaneseq
        %v654 = vshrl.u32 %v653, 7
        %v655 = vsub.s32 0, %v654
        %v656 = vrot.slane %v296, %v655
        %v657 = vlaneseq
        %v658 = vshrl.u32 %v657, 7
        %v659 = vsub.s32 1, %v658
        %v660 = vrot.slane %v296, %v659
        %v661 = vlaneseq
        %v662 = vshrl.u32 %v661, 7
        %v663 = vsub.s32 2, %v662
        %v664 = vrot.slane %v296, %v663
        %v668 = vmul.f32 %v578, %v656
        %v669 = vmul.f32 %v580, %v660
        %v670 = vmul.f32 %v649, %v664
        %v671 = vadd.f32 %v668, %v669
        %v672 = vadd.f32 %v671, %v670
        %673 = vadd.xlane.f32.xlu0 %v672
        %v674 = vpop.xlane.xlu0 %673
        %v675 = vmul.f32 %v674, 0.00390625
        %v676 = vsub.f32 %v578, %v675
        %v677 = vsub.f32 %v580, %v675
        %v678 = vsub.f32 %v649, %v675
        %v679 = vmul.f32 %v676, %v656
        %v680 = vmul.f32 %v677, %v660
        %v681 = vmul.f32 %v678, %v664
        %v682 = vmul.f32 %v679, %v679
        %v683 = vmul.f32 %v680, %v680
        %v684 = vmul.f32 %v681, %v681
        %v685 = vadd.f32 %v682, %v683
        %v686 = vadd.f32 %v685, %v684
        %687 = vadd.xlane.f32.xlu0 %v686
        %v688 = vpop.xlane.xlu0 %687
        %v689 = vmul.f32 %v688, 0.00390625
        %v690 = vadd.f32 %v689, 1e-05
        %v691 = vrsqrt.pop %v690
        %v692 = vmul.f32 %v676, %v691
        %v693 = vmul.f32 %v677, %v691
        %v694 = vmul.f32 %v678, %v691
        %v695 = vmax.f32 %v692, 0.0
        %v696 = vmax.f32 %v693, 0.0
        %v697 = vmax.f32 %v694, 0.0
        %698 = vrot.lane.b32.xlu0 %v695, 92
        %v699 = vpop.permute.xlu0 %698
        %700 = vrot.lane.b32.xlu0 %v696, 92
        %v701 = vpop.permute.xlu0 %700
        %702 = vrot.lane.b32.xlu0 %v697, 92
        %v703 = vpop.permute.xlu0 %702
        %v704 = vsel %vm312, %v701, %v703
        %v705 = vsel %vm312, %v699, %v701
        %v706 = vsel %vm312, %v703, %v699
        %v707 = vsel %vm329, %v705, %v695
        %v708 = vsel %vm330, %v704, %v696
        %v709 = vsel %vm331, %v706, %v697
        %710 = vrot.lane.b32.xlu0 %v707, 36
        %v711 = vpop.permute.xlu0 %710
        %712 = vrot.lane.b32.xlu0 %v708, 36
        %v713 = vpop.permute.xlu0 %712
        %714 = vrot.lane.b32.xlu0 %v709, 36
        %v715 = vpop.permute.xlu0 %714
        %v716 = vsel %vm341, %v713, %v715
        %v717 = vsel %vm341, %v711, %v713
        %v718 = vsel %vm341, %v715, %v711
        %v719 = vsel %vm358, %v718, %v707
        %v720 = vsel %vm359, %v717, %v708
        %v721 = vsel %vm360, %v716, %v709
        %722 = vrot.lane.b32.xlu0 %v719, 126
        %v723 = vpop.permute.xlu0 %722
        %724 = vrot.lane.b32.xlu0 %v720, 126
        %v725 = vpop.permute.xlu0 %724
        %726 = vrot.lane.b32.xlu0 %v721, 126
        %v727 = vpop.permute.xlu0 %726
        %v728 = vsel %vm370, %v725, %v727
        %v729 = vsel %vm370, %v723, %v725
        %v730 = vsel %vm370, %v727, %v723
        %v731 = vsel %vm387, %v729, %v719
        %v732 = vsel %vm388, %v728, %v720
        %v733 = vsel %vm389, %v730, %v721
        %734 = vrot.lane.b32.xlu0 %v731, 2
        %v735 = vpop.permute.xlu0 %734
        %736 = vrot.lane.b32.xlu0 %v732, 2
        %v737 = vpop.permute.xlu0 %736
        %738 = vrot.lane.b32.xlu0 %v733, 2
        %v739 = vpop.permute.xlu0 %738
        %v740 = vsel %vm399, %v737, %v739
        %v741 = vsel %vm399, %v735, %v737
        %v742 = vsel %vm399, %v739, %v735
        %v743 = vsel %vm416, %v742, %v731
        %v744 = vsel %vm417, %v741, %v732
        %v745 = vsel %vm418, %v740, %v733
        %746 = vrot.lane.b32.xlu0 %v743, 19
        %v747 = vpop.permute.xlu0 %746
        %748 = vrot.lane.b32.xlu0 %v744, 19
        %v749 = vpop.permute.xlu0 %748
        %750 = vrot.lane.b32.xlu0 %v745, 19
        %v751 = vpop.permute.xlu0 %750
        %v752 = vsel %vm428, %v749, %v751
        %v753 = vsel %vm428, %v747, %v749
        %v754 = vsel %vm428, %v751, %v747
        %755 = vrot.lane.b32.xlu0 %v743, 18
        %v756 = vpop.permute.xlu0 %755
        %757 = vrot.lane.b32.xlu0 %v744, 18
        %v758 = vpop.permute.xlu0 %757
        %759 = vrot.lane.b32.xlu0 %v745, 18
        %v760 = vpop.permute.xlu0 %759
        %v761 = vsel %vm438, %v758, %v760
        %v762 = vsel %vm438, %v756, %v758
        %v763 = vsel %vm438, %v760, %v756
        %764 = vrot.lane.b32.xlu0 %v743, 17
        %v765 = vpop.permute.xlu0 %764
        %766 = vrot.lane.b32.xlu0 %v744, 17
        %v767 = vpop.permute.xlu0 %766
        %768 = vrot.lane.b32.xlu0 %v745, 17
        %v769 = vpop.permute.xlu0 %768
        %v770 = vsel %vm448, %v767, %v769
        %v771 = vsel %vm448, %v765, %v767
        %v772 = vsel %vm448, %v769, %v765
        %773 = vrot.lane.b32.xlu0 %v743, 1
        %v774 = vpop.permute.xlu0 %773
        %775 = vrot.lane.b32.xlu0 %v744, 1
        %v776 = vpop.permute.xlu0 %775
        %777 = vrot.lane.b32.xlu0 %v745, 1
        %v778 = vpop.permute.xlu0 %777
        %v779 = vsel %vm458, %v776, %v778
        %v780 = vsel %vm458, %v774, %v776
        %v781 = vsel %vm458, %v778, %v774
        %782 = vrot.lane.b32.xlu0 %v743, 127
        %v783 = vpop.permute.xlu0 %782
        %784 = vrot.lane.b32.xlu0 %v744, 127
        %v785 = vpop.permute.xlu0 %784
        %786 = vrot.lane.b32.xlu0 %v745, 127
        %v787 = vpop.permute.xlu0 %786
        %v788 = vsel %vm468, %v785, %v787
        %v789 = vsel %vm468, %v783, %v785
        %v790 = vsel %vm468, %v787, %v783
        %791 = vrot.lane.b32.xlu0 %v743, 111
        %v792 = vpop.permute.xlu0 %791
        %793 = vrot.lane.b32.xlu0 %v744, 111
        %v794 = vpop.permute.xlu0 %793
        %795 = vrot.lane.b32.xlu0 %v745, 111
        %v796 = vpop.permute.xlu0 %795
        %v797 = vsel %vm478, %v794, %v796
        %v798 = vsel %vm478, %v792, %v794
        %v799 = vsel %vm478, %v796, %v792
        %800 = vrot.lane.b32.xlu0 %v743, 110
        %v801 = vpop.permute.xlu0 %800
        %802 = vrot.lane.b32.xlu0 %v744, 110
        %v803 = vpop.permute.xlu0 %802
        %804 = vrot.lane.b32.xlu0 %v745, 110
        %v805 = vpop.permute.xlu0 %804
        %v806 = vsel %vm488, %v803, %v805
        %v807 = vsel %vm488, %v801, %v803
        %v808 = vsel %vm488, %v805, %v801
        %809 = vrot.lane.b32.xlu0 %v743, 109
        %v810 = vpop.permute.xlu0 %809
        %811 = vrot.lane.b32.xlu0 %v744, 109
        %v812 = vpop.permute.xlu0 %811
        %813 = vrot.lane.b32.xlu0 %v745, 109
        %v814 = vpop.permute.xlu0 %813
        %v815 = vsel %vm498, %v812, %v814
        %v816 = vsel %vm498, %v810, %v812
        %v817 = vsel %vm498, %v814, %v810
        %819 = vset.pattern.permute.xlu0 0
        %820 = vperm.xlu0 %819, %v300
        %v821 = vpop.permute.xlu0 %820
        %v824 = vsel %vm507, %v298, 0
        %826 = vmatprep.subr.mxu0 %v753
        %827 = vmatpush1.msra.mxu0 %v754
        %828 = vmatprep.subr.mxu0 %v762
        %829 = vmatpush1.msra.mxu0 %v763
        %830 = vmatprep.subr.mxu0 %v771
        %831 = vmatpush1.msra.mxu0 %v772
        %832 = vmatprep.subr.mxu0 %v780
        %833 = vmatpush1.msra.mxu0 %v781
        %834 = vmatprep.subr.mxu0 %v744
        %835 = vmatpush1.msra.mxu0 %v743
        %836 = vmatprep.subr.mxu0 %v788
        %837 = vmatpush1.msra.mxu0 %v789
        %838 = vmatprep.subr.mxu0 %v797
        %839 = vmatpush1.msra.mxu0 %v798
        %840 = vmatprep.subr.mxu0 %v806
        %841 = vmatpush1.msra.mxu0 %v807
        %842 = vmatprep.subr.mxu0 %v815
        %843 = vmatpush1.msra.mxu0 %v816
        %844 = vmatprep.subr.mxu0 0.0
        %845 = vmatpush1.msra.mxu0 0.0
        %846 = vmatprep.subr.mxu0 0.0
        %847 = vmatpush1.msra.mxu0 0.0
        %848 = vmatprep.subr.mxu0 0.0
        %849 = vmatpush1.msra.mxu0 0.0
        %850 = vmatprep.subr.mxu0 0.0
        %851 = vmatpush1.msra.mxu0 0.0
        %852 = vmatprep.subr.mxu0 0.0
        %853 = vmatpush1.msra.mxu0 0.0
        %854 = vmatprep.subr.mxu0 0.0
        %855 = vmatpush1.msra.mxu0 0.0
        %856 = vmatprep.subr.mxu0 0.0
        %857 = vmatpush1.msra.mxu0 0.0
        %858 = vmatprep.subr.mxu0 0.0
        %859 = vmatpush1.msra.mxu0 0.0
        %860 = vmatprep.subr.mxu0 0.0
        %861 = vmatpush1.msra.mxu0 0.0
        %862 = vmatprep.subr.mxu0 0.0
        %863 = vmatpush1.msra.mxu0 0.0
        %864 = vmatprep.subr.mxu0 0.0
        %865 = vmatpush1.msra.mxu0 0.0
        %866 = vmatprep.subr.mxu0 0.0
        %867 = vmatpush1.msra.mxu0 0.0
        %868 = vmatprep.subr.mxu0 0.0
        %869 = vmatpush1.msra.mxu0 0.0
        %870 = vmatprep.subr.mxu0 0.0
        %871 = vmatpush1.msra.mxu0 0.0
        %872 = vmatprep.subr.mxu0 0.0
        %873 = vmatpush1.msra.mxu0 0.0
        %874 = vmatprep.subr.mxu0 0.0
        %875 = vmatpush1.msra.mxu0 0.0
        %876 = vmatprep.subr.mxu0 0.0
        %877 = vmatpush1.msra.mxu0 0.0
        %878 = vmatprep.subr.mxu0 0.0
        %879 = vmatpush1.msra.mxu0 0.0
        %880 = vmatprep.subr.mxu0 0.0
        %881 = vmatpush1.msra.mxu0 0.0
        %882 = vmatprep.subr.mxu0 0.0
        %883 = vmatpush1.msra.mxu0 0.0
        %884 = vmatprep.subr.mxu0 0.0
        %885 = vmatpush1.msra.mxu0 0.0
        %886 = vmatprep.subr.mxu0 0.0
        %887 = vmatpush1.msra.mxu0 0.0
        %888 = vmatprep.subr.mxu0 0.0
        %889 = vmatpush1.msra.mxu0 0.0
        %890 = vmatprep.mubr.f32.mxu0 0.0
        %891 = vmatmul.mubr.f32.gmra.mrb[0].mxu0 %v824
        %v892 = vpop.f32.mrb[0].mxu0
        %v893 = vadd.f32 %v821, %v892
        %v894 = vpop.f32.mrb[0].mxu0
        %v895 = vadd.f32 %v821, %v894
        %896 = vdwg.mxu0
        %897 = vmatprep.subr.mxu0 0.0
        %898 = vmatpush1.msra.mxu0 %v752
        %899 = vmatprep.subr.mxu0 0.0
        %900 = vmatpush1.msra.mxu0 %v761
        %901 = vmatprep.subr.mxu0 0.0
        %902 = vmatpush1.msra.mxu0 %v770
        %903 = vmatprep.subr.mxu0 0.0
        %904 = vmatpush1.msra.mxu0 %v779
        %905 = vmatprep.subr.mxu0 0.0
        %906 = vmatpush1.msra.mxu0 %v745
        %907 = vmatprep.subr.mxu0 0.0
        %908 = vmatpush1.msra.mxu0 %v790
        %909 = vmatprep.subr.mxu0 0.0
        %910 = vmatpush1.msra.mxu0 %v799
        %911 = vmatprep.subr.mxu0 0.0
        %912 = vmatpush1.msra.mxu0 %v808
        %913 = vmatprep.subr.mxu0 0.0
        %914 = vmatpush1.msra.mxu0 %v817
        %915 = vmatprep.subr.mxu0 0.0
        %916 = vmatpush1.msra.mxu0 0.0
        %917 = vmatprep.subr.mxu0 0.0
        %918 = vmatpush1.msra.mxu0 0.0
        %919 = vmatprep.subr.mxu0 0.0
        %920 = vmatpush1.msra.mxu0 0.0
        %921 = vmatprep.subr.mxu0 0.0
        %922 = vmatpush1.msra.mxu0 0.0
        %923 = vmatprep.subr.mxu0 0.0
        %924 = vmatpush1.msra.mxu0 0.0
        %925 = vmatprep.subr.mxu0 0.0
        %926 = vmatpush1.msra.mxu0 0.0
        %927 = vmatprep.subr.mxu0 0.0
        %928 = vmatpush1.msra.mxu0 0.0
        %929 = vmatprep.subr.mxu0 0.0
        %930 = vmatpush1.msra.mxu0 0.0
        %931 = vmatprep.subr.mxu0 0.0
        %932 = vmatpush1.msra.mxu0 0.0
        %933 = vmatprep.subr.mxu0 0.0
        %934 = vmatpush1.msra.mxu0 0.0
        %935 = vmatprep.subr.mxu0 0.0
        %936 = vmatpush1.msra.mxu0 0.0
        %937 = vmatprep.subr.mxu0 0.0
        %938 = vmatpush1.msra.mxu0 0.0
        %939 = vmatprep.subr.mxu0 0.0
        %940 = vmatpush1.msra.mxu0 0.0
        %941 = vmatprep.subr.mxu0 0.0
        %942 = vmatpush1.msra.mxu0 0.0
        %943 = vmatprep.subr.mxu0 0.0
        %944 = vmatpush1.msra.mxu0 0.0
        %945 = vmatprep.subr.mxu0 0.0
        %946 = vmatpush1.msra.mxu0 0.0
        %947 = vmatprep.subr.mxu0 0.0
        %948 = vmatpush1.msra.mxu0 0.0
        %949 = vmatprep.subr.mxu0 0.0
        %950 = vmatpush1.msra.mxu0 0.0
        %951 = vmatprep.subr.mxu0 0.0
        %952 = vmatpush1.msra.mxu0 0.0
        %953 = vmatprep.subr.mxu0 0.0
        %954 = vmatpush1.msra.mxu0 0.0
        %955 = vmatprep.subr.mxu0 0.0
        %956 = vmatpush1.msra.mxu0 0.0
        %957 = vmatprep.subr.mxu0 0.0
        %958 = vmatpush1.msra.mxu0 0.0
        %959 = vmatprep.subr.mxu0 0.0
        %960 = vmatpush1.msra.mxu0 0.0
        %961 = vmatprep.mubr.f32.mxu0 0.0
        %962 = vmatmul.mubr.f32.gmra.mrb[0].mxu0 %v824
        %v963 = vpop.f32.mrb[0].mxu0
        %v964 = vadd.f32 %v821, %v963
        %v965 = vpop.f32.mrb[0].mxu0
        %966 = vdwg.mxu0
        %v967 = vmul.f32 %v893, %v656
        %v968 = vmul.f32 %v895, %v660
        %v969 = vmul.f32 %v964, %v664
        %v970 = vadd.f32 %v967, %v968
        %v971 = vadd.f32 %v970, %v969
        %972 = vadd.xlane.f32.xlu0 %v971
        %v973 = vpop.xlane.xlu0 %972
        %v974 = vmul.f32 %v973, 0.00390625
        %v975 = vsub.f32 %v893, %v974
        %v976 = vsub.f32 %v895, %v974
        %v977 = vsub.f32 %v964, %v974
        %v978 = vmul.f32 %v975, %v656
        %v979 = vmul.f32 %v976, %v660
        %v980 = vmul.f32 %v977, %v664
        %v981 = vmul.f32 %v978, %v978
        %v982 = vmul.f32 %v979, %v979
        %v983 = vmul.f32 %v980, %v980
        %v984 = vadd.f32 %v981, %v982
        %v985 = vadd.f32 %v984, %v983
        %986 = vadd.xlane.f32.xlu0 %v985
        %v987 = vpop.xlane.xlu0 %986
        %v988 = vmul.f32 %v987, 0.00390625
        %v989 = vadd.f32 %v988, 1e-05
        %v990 = vrsqrt.pop %v989
        %v991 = vmul.f32 %v975, %v990
        %v992 = vmul.f32 %v976, %v990
        %v993 = vmul.f32 %v977, %v990
        %v994 = vadd.f32 %v419, %v991
        %v995 = vadd.f32 %v420, %v992
        %v996 = vadd.f32 %v421, %v993
        %997 = vst [vmem:[%s280] sm:$0xff] %v994
        %998 = vst [vmem:[%s280 + $0x8] sm:$0xff] %v995
        %999 = vst [vmem:[%s280 + $0x10] sm:$0xff] %v996
        %s1000 = sand.u32 %s163, 1
        %s1001 = scalar_lea.sflag [#allocation4], %s1000
        %s1002 = sand.u32 %s163, 1
        %s1003 = smul.addr %s1002, 24
        %s1004 = scalar_lea.vmem [#allocation7], %s1003
        // Predicated region
        $region53: #{tpu_custom_call.1} parent=43 // pred_check
          %p1005 = pneg %p173
        $region54: #{tpu_custom_call.1} parent=43 // pred_check_branch
          %1007 = sbr.rel (%p1005) target = $region56
        $region55: #{tpu_custom_call.1} parent=43 // pred_region
          %s1009 = ssub.s32 384, 384
          %1010 = vsyncadd %s1001, %s1009
          %s1011 = smul.addr %s24, 3
          %s1012 = smul.addr %s1011, 128
          %s1013 = scalar_lea.hbm %s6, %s1012
          %s1015 = sshll.u32 %s1004, 4
          %s1016 = int_to_ptr.vmem [resolvable:$true] %s1015
          %1018 = dma.vmem_to_hbm [thread:$0]  %s1016, 384, %s1013, %s1001
        $region56: #{tpu_custom_call.1} parent=43 // pred_fallthru
          _
      $region44: #{tpu_custom_call.1} parent=5 // pred_fallthru
        _
      %p1019 = scmp.le.s32.totalorder 2, %s19
      // Predicated region
      $region57: #{tpu_custom_call.1} parent=5 // pred_check
        %p1020 = pneg %p1019
      $region58: #{tpu_custom_call.1} parent=5 // pred_check_branch
        %1022 = sbr.rel (%p1020) target = $region60
      $region59: #{tpu_custom_call.1} parent=5 // pred_region
        %s1023 = ssub.s32 %s19, 2
        // Predicated region
        $region61: #{tpu_custom_call.1} parent=59 // pred_check
          %p1024 = pneg %p179
        $region62: #{tpu_custom_call.1} parent=59 // pred_check_branch
          %1026 = sbr.rel (%p1024) target = $region64
        $region63: #{tpu_custom_call.1} parent=59 // pred_region
          %s1027 = sand.u32 %s164, 1
          %s1028 = scalar_lea.sflag [#allocation4], %s1027
          %s1029 = sand.u32 %s164, 1
          %s1030 = smul.addr %s1029, 24
          %s1031 = scalar_lea.vmem [#allocation7], %s1030
          %1032 = dma.done %s1028, 384
        $region64: #{tpu_custom_call.1} parent=59 // pred_fallthru
          _
      $region60: #{tpu_custom_call.1} parent=5 // pred_fallthru
        _
    $region6: #{tpu_custom_call.1} parent=1 // loop_footer
      %s23 = sadd.s32 1, %s19
    $region7: #{tpu_custom_call.1} parent=1 // loop_footer_branch
      %18 = sbr.rel target = $region3
    $region8: #{tpu_custom_call.1} parent=1 // loop_exit
      _
    %1033 = vsyncpa [#allocation3], 1
    %s1034 = scalar_lea.sflag [#allocation3], 1
    %1035 = vsyncpa %s1034, 1
    %1036 = vsyncpa [#allocation6], 1
    %1037 = vsyncpa [#allocation4], 1
    %s1038 = scalar_lea.sflag [#allocation4], 1
    %1039 = vsyncpa %s1038, 1

</llo_original>
